<compile_context>
chip_gen: v5e
topology: v5e:2x2
jax: 0.10.0
libtpu: 0.0.40
codegen_flags: <defaults>
</compile_context>

<pallas_src>
import functools

import jax
import jax.numpy as jnp
import numpy as np
from jax.experimental import pallas as pl
from jax.experimental.pallas import tpu as pltpu


# ---------------------------------------------------------------------------
# Fused Pallas kernel: input projection + LSTM recurrence + decoder epilogue
# ---------------------------------------------------------------------------

def _lstm_ed_kernel(x_ref, wcomb_ref, bcomb_ref, whh_ref, wdec_ref, bdec_ref,
                    out_ref, h_scr, c_scr, gx_scr, hs_scr, *, hidden, tt, feat):
    """One grid step = one (batch-tile, TT-time-step) chunk of the forward."""
    t = pl.program_id(1)

    @pl.when(t == 0)
    def _():
        h_scr[...] = jnp.zeros_like(h_scr)
        c_scr[...] = jnp.zeros_like(c_scr)

    bt = h_scr.shape[0]
    H = hidden
    F = feat
    G = 4 * H

    # Resident weights / biases (loaded once per grid step).
    w_comb = wcomb_ref[...]          # (F, 4H)  bf16, fused encoder + W_ih^T
    b_comb = bcomb_ref[...]          # (1, 4H)  f32
    w_hh = whh_ref[...]              # (H, 4H)  bf16
    w_dec = wdec_ref[...]            # (H, F)   bf16
    b_dec = bdec_ref[...]            # (1, F)   f32

    # ---- Hoisted input projection: one big MXU op off the critical path ----
    # (bt, tt, F) -> (bt*tt, F) is a sublane-only collapse (tt % 8 == 0).
    x2 = x_ref[...].reshape(bt * tt, F).astype(jnp.bfloat16)
    gx = jnp.dot(x2, w_comb, preferred_element_type=jnp.float32) + b_comb
    gx_scr[...] = gx.reshape(bt, tt, G)

    # ---- Recurrence: only h @ W_hh stays on the serial dependency chain ----
    h = h_scr[...]                   # (bt, H) f32 state
    c = c_scr[...]                   # (bt, H) f32 state
    for s in range(tt):              # static unroll; scratch bounds live ranges
        gates = gx_scr[:, s, :] + jnp.dot(
            h.astype(jnp.bfloat16), w_hh, preferred_element_type=jnp.float32)
        # One full-width (4H lane-dense) sigmoid instead of 3 sub-128 slices.
        sig = jax.nn.sigmoid(gates)
        i_g = sig[:, 0 * H:1 * H]
        f_g = sig[:, 1 * H:2 * H]
        o_g = sig[:, 3 * H:4 * H]
        g_g = jnp.tanh(gates[:, 2 * H:3 * H])

        c = f_g * c + i_g * g_g
        h = o_g * jnp.tanh(c)
        hs_scr[:, s, :] = h          # stash for the batched decoder epilogue

    h_scr[...] = h
    c_scr[...] = c

    # ---- Batched decoder epilogue: one MXU op + one block store ------------
    hs = hs_scr[...].reshape(bt * tt, H).astype(jnp.bfloat16)
    dec = jnp.dot(hs, w_dec, preferred_element_type=jnp.float32) + b_dec
    out_ref[...] = dec.reshape(bt, tt, F).astype(out_ref.dtype)


def _pick_time_chunk(T, max_tt=32):
    """Largest chunk <= max_tt dividing T, preferring multiples of 8."""
    if T <= max_tt:
        return T
    for cand in range(max_tt, 7, -1):          # sublane-aligned divisors first
        if T % cand == 0 and cand % 8 == 0:
            return cand
    for cand in range(max_tt, 0, -1):          # any divisor (bounds the unroll)
        if T % cand == 0:
            return cand
    return T


def _pick_batch_tile(B):
    if B >= 512 and B % 256 == 0:
        return 256          # fill the v6e/v7x 256-wide MXU M dimension
    if B > 128 and B % 128 == 0:
        return 128
    if B >= 16 and B % 2 == 0:
        return B // 2       # >=2 tiles so v7x's second TensorCore gets work
    return B


def pallas_lstm_ed(x, w_comb_t, b_comb, w_hh_t, w_dec_t, b_dec, hidden):
    B, T, F = x.shape
    G = 4 * hidden
    tt = _pick_time_chunk(T)
    bt = _pick_batch_tile(B)
    grid = (B // bt, T // tt)

    kernel = functools.partial(_lstm_ed_kernel, hidden=hidden, tt=tt, feat=F)
    resident = lambda b, t: (0, 0)

    # Rough VMEM working-set estimate; only raise the scoped limit if needed.
    est = (2 * 2 * bt * tt * F * 4            # x in + out, double-buffered
           + bt * tt * G * 4                  # gx scratch
           + bt * tt * hidden * 4             # hs scratch
           + 2 * bt * hidden * 4              # h, c
           + 2 * 2 * (F * G + hidden * G + hidden * F)   # bf16 weights (x2 buf)
           + 2 * 4 * (G + F))                 # biases
    vmem_limit = None
    if est > (16 << 20):
        vmem_limit = int(min(est * 3 // 2 + (1 << 20), 64 << 20))

    return pl.pallas_call(
        kernel,
        out_shape=jax.ShapeDtypeStruct((B, T, F), jnp.float32),
        grid=grid,
        in_specs=[
            pl.BlockSpec((bt, tt, F), lambda b, t: (b, t, 0)),   # x chunk
            pl.BlockSpec((F, G), resident),                      # W_comb^T bf16
            pl.BlockSpec((1, G), resident),                      # b_comb
            pl.BlockSpec((hidden, G), resident),                 # W_hh^T  bf16
            pl.BlockSpec((hidden, F), resident),                 # W_dec^T bf16
            pl.BlockSpec((1, F), resident),                      # b_dec
        ],
        out_specs=pl.BlockSpec((bt, tt, F), lambda b, t: (b, t, 0)),
        scratch_shapes=[
            pltpu.VMEM((bt, hidden), jnp.float32),       # h state
            pltpu.VMEM((bt, hidden), jnp.float32),       # c state
            pltpu.VMEM((bt, tt, G), jnp.float32),        # hoisted x-projection
            pltpu.VMEM((bt, tt, hidden), jnp.float32),   # per-step h stash
        ],
        compiler_params=pltpu.CompilerParams(
            dimension_semantics=("parallel", "arbitrary"),
            vmem_limit_bytes=vmem_limit,
        ),
    )(x, w_comb_t, b_comb, w_hh_t, w_dec_t, b_dec)


# ---------------------------------------------------------------------------
# Params + wrapper (weight fusion / transposition is tiny one-time XLA work)
# ---------------------------------------------------------------------------

def init_params(key, input_size, embed_size, hidden_size):
    ks = jax.random.split(key, 8)

    def unif(k, shape, fan_in):
        bound = 1.0 / np.sqrt(fan_in)
        return jax.random.uniform(k, shape, jnp.float32, -bound, bound)

    return {
        "w_enc": unif(ks[0], (embed_size, input_size), input_size),
        "b_enc": unif(ks[1], (embed_size,), input_size),
        "w_ih": unif(ks[2], (4 * hidden_size, embed_size), hidden_size),
        "w_hh": unif(ks[3], (4 * hidden_size, hidden_size), hidden_size),
        "b_ih": unif(ks[4], (4 * hidden_size,), hidden_size),
        "b_hh": unif(ks[5], (4 * hidden_size,), hidden_size),
        "w_dec": unif(ks[6], (input_size, hidden_size), hidden_size),
        "b_dec": unif(ks[7], (input_size,), hidden_size),
    }


@functools.partial(jax.jit, static_argnames=("hidden_size",))
def lstm_ed_forward(params, x, hidden_size):
    # Algebraic fusion of encoder + LSTM input projection (dropout == identity
    # in eval mode):  x @ W_enc^T @ W_ih^T + (W_ih @ b_enc + b_ih + b_hh)
    # Weights cast to bf16 (MXU-native on all generations); biases and the
    # in-kernel h/c state stay f32.
    w_comb_t = (params["w_ih"] @ params["w_enc"]).T.astype(jnp.bfloat16)  # (F,4H)
    b_comb = (params["w_ih"] @ params["b_enc"]
              + params["b_ih"] + params["b_hh"])[None, :]                 # (1,4H)
    w_hh_t = params["w_hh"].T.astype(jnp.bfloat16)                        # (H,4H)
    w_dec_t = params["w_dec"].T.astype(jnp.bfloat16)                      # (H,F)
    b_dec = params["b_dec"][None, :]                                      # (1,F)
    return pallas_lstm_ed(x, w_comb_t, b_comb, w_hh_t, w_dec_t, b_dec,
                          hidden_size)


def lstm_ed_reference(params, x, hidden_size):
    """Pure-JAX f32 reference (mirrors the PyTorch forward in eval mode)."""
    B, T, F = x.shape
    enc = x.reshape(B * T, F) @ params["w_enc"].T + params["b_enc"]
    enc = enc.reshape(B, T, -1)

    w_ih, w_hh = params["w_ih"], params["w_hh"]
    b = params["b_ih"] + params["b_hh"]
    H = hidden_size

    def step(carry, x_t):
        h, c = carry
        gates = x_t @ w_ih.T + h @ w_hh.T + b
        i = jax.nn.sigmoid(gates[:, 0 * H:1 * H])
        f = jax.nn.sigmoid(gates[:, 1 * H:2 * H])
        g = jnp.tanh(gates[:, 2 * H:3 * H])
        o = jax.nn.sigmoid(gates[:, 3 * H:4 * H])
        c = f * c + i * g
        h = o * jnp.tanh(c)
        return (h, c), h

    h0 = jnp.zeros((B, H), jnp.float32)
    c0 = jnp.zeros((B, H), jnp.float32)
    _, hs = jax.lax.scan(step, (h0, c0), enc.transpose(1, 0, 2))  # (T, B, H)
    out = hs.transpose(1, 0, 2).reshape(B * T, H)
    dec = out @ params["w_dec"].T + params["b_dec"]
    return dec.reshape(B, T, F)


if __name__ == "__main__":
    input_size = 16
    embed_size = 32
    hidden_size = 32

    key = jax.random.PRNGKey(0)
    k_params, k_x1, k_x2 = jax.random.split(key, 3)
    params = init_params(k_params, input_size, embed_size, hidden_size)

    # bf16 MXU operands vs. f32 reference -> loosen tolerance (h/c stay f32).
    TOL = 3e-2

    # Test 1: single grid step (B=2, T=8).
    x1 = jax.random.normal(k_x1, (2, 8, input_size), jnp.float32)
    out1 = jax.block_until_ready(lstm_ed_forward(params, x1, hidden_size))
    ref1 = lstm_ed_reference(params, x1, hidden_size)
    np.testing.assert_allclose(np.asarray(out1), np.asarray(ref1),
                               rtol=TOL, atol=TOL)

    # Test 2: multi-tile grid (B=16 -> 2 batch tiles, T=64 -> 2 time chunks),
    # exercising the h/c carry across grid steps and the "parallel" batch axis.
    x2 = jax.random.normal(k_x2, (16, 64, input_size), jnp.float32)
    out2 = jax.block_until_ready(lstm_ed_forward(params, x2, hidden_size))
    ref2 = lstm_ed_reference(params, x2, hidden_size)
    np.testing.assert_allclose(np.asarray(out2), np.asarray(ref2),
                               rtol=TOL, atol=TOL)

    print("KERNEL_OK")
</pallas_src>

<mosaic_0001>
module attributes {stable_mosaic.version = 11 : i64} {
  func.func @_lstm_ed_kernel(%arg0: i32, %arg1: i32, %arg2: memref<2x8x16xf32, #tpu.memory_space<vmem>>, %arg3: memref<16x128xbf16, #tpu.memory_space<vmem>>, %arg4: memref<1x128xf32, #tpu.memory_space<vmem>>, %arg5: memref<32x128xbf16, #tpu.memory_space<vmem>>, %arg6: memref<32x16xbf16, #tpu.memory_space<vmem>>, %arg7: memref<1x16xf32, #tpu.memory_space<vmem>>, %arg8: memref<2x8x16xf32, #tpu.memory_space<vmem>>, %arg9: memref<2x32xf32, #tpu.memory_space<vmem>>, %arg10: memref<2x32xf32, #tpu.memory_space<vmem>>, %arg11: memref<2x8x128xf32, #tpu.memory_space<vmem>>, %arg12: memref<2x8x32xf32, #tpu.memory_space<vmem>>) attributes {dimension_semantics = [#tpu.dimension_semantics<parallel>, #tpu.dimension_semantics<arbitrary>], iteration_bounds = array<i64: 1, 1>, scalar_prefetch = 0 : i64, scratch_operands = 4 : i64, tpu.core_type = #tpu.core_type<tc>, window_params = [{transform_indices = @transform_0, window_bounds = array<i64: 2, 8, 16>}, {pipeline_mode = #tpu.pipeline_mode<synchronous>, transform_indices = @transform_1, window_bounds = array<i64: 16, 128>}, {pipeline_mode = #tpu.pipeline_mode<synchronous>, transform_indices = @transform_2, window_bounds = array<i64: 1, 128>}, {pipeline_mode = #tpu.pipeline_mode<synchronous>, transform_indices = @transform_3, window_bounds = array<i64: 32, 128>}, {pipeline_mode = #tpu.pipeline_mode<synchronous>, transform_indices = @transform_4, window_bounds = array<i64: 32, 16>}, {pipeline_mode = #tpu.pipeline_mode<synchronous>, transform_indices = @transform_5, window_bounds = array<i64: 1, 16>}, {transform_indices = @transform_6, window_bounds = array<i64: 2, 8, 16>}]} {
    %c0_i32 = arith.constant 0 : i32
    %0 = arith.cmpi eq, %arg1, %c0_i32 : i32
    %1 = arith.extui %0 : i1 to i32
    %c0_i32_0 = arith.constant 0 : i32
    %2 = arith.cmpi ne, %1, %c0_i32_0 : i32
    scf.if %2 {
      %cst_88 = arith.constant 0.000000e+00 : f32
      %212 = vector.broadcast %cst_88 : f32 to vector<2x32xf32>
      %c0_89 = arith.constant 0 : index
      %c0_90 = arith.constant 0 : index
      %213 = vector.load %arg9[%c0_89, %c0_90] : memref<2x32xf32, #tpu.memory_space<vmem>>, vector<2x32xf32>
      tpu.vector_store %arg9[%c0_89, %c0_90], %212 {strides = array<i32>} : memref<2x32xf32, #tpu.memory_space<vmem>>, vector<2x32xf32>,
      %cst_91 = arith.constant 0.000000e+00 : f32
      %214 = vector.broadcast %cst_91 : f32 to vector<2x32xf32>
      %c0_92 = arith.constant 0 : index
      %c0_93 = arith.constant 0 : index
      %215 = vector.load %arg10[%c0_92, %c0_93] : memref<2x32xf32, #tpu.memory_space<vmem>>, vector<2x32xf32>
      tpu.vector_store %arg10[%c0_92, %c0_93], %214 {strides = array<i32>} : memref<2x32xf32, #tpu.memory_space<vmem>>, vector<2x32xf32>,
    } else {
    }
    %c0 = arith.constant 0 : index
    %c0_1 = arith.constant 0 : index
    %3 = vector.load %arg3[%c0, %c0_1] : memref<16x128xbf16, #tpu.memory_space<vmem>>, vector<16x128xbf16>
    %c0_2 = arith.constant 0 : index
    %c0_3 = arith.constant 0 : index
    %4 = vector.load %arg4[%c0_2, %c0_3] : memref<1x128xf32, #tpu.memory_space<vmem>>, vector<1x128xf32>
    %c0_4 = arith.constant 0 : index
    %c0_5 = arith.constant 0 : index
    %5 = vector.load %arg5[%c0_4, %c0_5] : memref<32x128xbf16, #tpu.memory_space<vmem>>, vector<32x128xbf16>
    %c0_6 = arith.constant 0 : index
    %c0_7 = arith.constant 0 : index
    %6 = vector.load %arg6[%c0_6, %c0_7] : memref<32x16xbf16, #tpu.memory_space<vmem>>, vector<32x16xbf16>
    %c0_8 = arith.constant 0 : index
    %c0_9 = arith.constant 0 : index
    %7 = vector.load %arg7[%c0_8, %c0_9] : memref<1x16xf32, #tpu.memory_space<vmem>>, vector<1x16xf32>
    %c0_10 = arith.constant 0 : index
    %c0_11 = arith.constant 0 : index
    %c0_12 = arith.constant 0 : index
    %8 = vector.load %arg2[%c0_10, %c0_11, %c0_12] : memref<2x8x16xf32, #tpu.memory_space<vmem>>, vector<2x8x16xf32>
    %9 = vector.shape_cast %8 : vector<2x8x16xf32> to vector<16x16xf32>
    %10 = arith.truncf %9 : vector<16x16xf32> to vector<16x16xbf16>
    %cst = arith.constant dense<0.000000e+00> : vector<16x128xf32>
    %11 = tpu.matmul %10, %3, %cst {dimension_numbers = #tpu.dot_dimension_numbers<[1], [0], [0], [1], [0, 0, 1, 1], [], []>} : vector<16x16xbf16>, vector<16x128xbf16>, vector<16x128xf32> -> vector<16x128xf32>
    %12 = vector.broadcast %4 : vector<1x128xf32> to vector<16x128xf32>
    %13 = arith.addf %11, %12 : vector<16x128xf32>
    %14 = vector.shape_cast %13 : vector<16x128xf32> to vector<2x8x128xf32>
    %c0_13 = arith.constant 0 : index
    %c0_14 = arith.constant 0 : index
    %c0_15 = arith.constant 0 : index
    %15 = vector.load %arg11[%c0_13, %c0_14, %c0_15] : memref<2x8x128xf32, #tpu.memory_space<vmem>>, vector<2x8x128xf32>
    tpu.vector_store %arg11[%c0_13, %c0_14, %c0_15], %14 {strides = array<i32>} : memref<2x8x128xf32, #tpu.memory_space<vmem>>, vector<2x8x128xf32>,
    %c0_16 = arith.constant 0 : index
    %c0_17 = arith.constant 0 : index
    %16 = vector.load %arg9[%c0_16, %c0_17] : memref<2x32xf32, #tpu.memory_space<vmem>>, vector<2x32xf32>
    %c0_18 = arith.constant 0 : index
    %c0_19 = arith.constant 0 : index
    %17 = vector.load %arg10[%c0_18, %c0_19] : memref<2x32xf32, #tpu.memory_space<vmem>>, vector<2x32xf32>
    %c0_20 = arith.constant 0 : index
    %c0_21 = arith.constant 0 : index
    %c0_22 = arith.constant 0 : index
    %18 = vector.load %arg11[%c0_20, %c0_21, %c0_22] : memref<2x8x128xf32, #tpu.memory_space<vmem>>, vector<2x1x128xf32>
    %19 = vector.shape_cast %18 : vector<2x1x128xf32> to vector<2x128xf32>
    %20 = arith.truncf %16 : vector<2x32xf32> to vector<2x32xbf16>
    %cst_23 = arith.constant dense<0.000000e+00> : vector<2x128xf32>
    %21 = tpu.matmul %20, %5, %cst_23 {dimension_numbers = #tpu.dot_dimension_numbers<[1], [0], [0], [1], [0, 0, 1, 1], [], []>} : vector<2x32xbf16>, vector<32x128xbf16>, vector<2x128xf32> -> vector<2x128xf32>
    %22 = arith.addf %19, %21 : vector<2x128xf32>
    %23 = arith.negf %22 : vector<2x128xf32>
    %24 = math.exp %23 : vector<2x128xf32>
    %cst_24 = arith.constant 1.000000e+00 : f32
    %25 = vector.broadcast %cst_24 : f32 to vector<2x128xf32>
    %26 = arith.addf %25, %24 : vector<2x128xf32>
    %27 = arith.divf %25, %26 : vector<2x128xf32>
    %28 = vector.extract_strided_slice %27 {offsets = [0, 0], sizes = [2, 32], strides = [1, 1]} : vector<2x128xf32> to vector<2x32xf32>
    %29 = vector.extract_strided_slice %27 {offsets = [0, 32], sizes = [2, 32], strides = [1, 1]} : vector<2x128xf32> to vector<2x32xf32>
    %30 = vector.extract_strided_slice %27 {offsets = [0, 96], sizes = [2, 32], strides = [1, 1]} : vector<2x128xf32> to vector<2x32xf32>
    %31 = vector.extract_strided_slice %22 {offsets = [0, 64], sizes = [2, 32], strides = [1, 1]} : vector<2x128xf32> to vector<2x32xf32>
    %32 = math.tanh %31 : vector<2x32xf32>
    %33 = arith.mulf %29, %17 : vector<2x32xf32>
    %34 = arith.mulf %28, %32 : vector<2x32xf32>
    %35 = arith.addf %33, %34 : vector<2x32xf32>
    %36 = math.tanh %35 : vector<2x32xf32>
    %37 = arith.mulf %30, %36 : vector<2x32xf32>
    %c0_25 = arith.constant 0 : index
    %c0_26 = arith.constant 0 : index
    %c0_27 = arith.constant 0 : index
    %38 = vector.load %arg12[%c0_25, %c0_26, %c0_27] : memref<2x8x32xf32, #tpu.memory_space<vmem>>, vector<2x1x32xf32>
    %39 = vector.shape_cast %38 : vector<2x1x32xf32> to vector<2x32xf32>
    %40 = vector.shape_cast %37 : vector<2x32xf32> to vector<2x1x32xf32>
    tpu.vector_store %arg12[%c0_25, %c0_26, %c0_27], %40 {strides = array<i32>} : memref<2x8x32xf32, #tpu.memory_space<vmem>>, vector<2x1x32xf32>,
    %c0_28 = arith.constant 0 : index
    %c1 = arith.constant 1 : index
    %c0_29 = arith.constant 0 : index
    %41 = vector.load %arg11[%c0_28, %c1, %c0_29] : memref<2x8x128xf32, #tpu.memory_space<vmem>>, vector<2x1x128xf32>
    %42 = vector.shape_cast %41 : vector<2x1x128xf32> to vector<2x128xf32>
    %43 = arith.truncf %37 : vector<2x32xf32> to vector<2x32xbf16>
    %cst_30 = arith.constant dense<0.000000e+00> : vector<2x128xf32>
    %44 = tpu.matmul %43, %5, %cst_30 {dimension_numbers = #tpu.dot_dimension_numbers<[1], [0], [0], [1], [0, 0, 1, 1], [], []>} : vector<2x32xbf16>, vector<32x128xbf16>, vector<2x128xf32> -> vector<2x128xf32>
    %45 = arith.addf %42, %44 : vector<2x128xf32>
    %46 = arith.negf %45 : vector<2x128xf32>
    %47 = math.exp %46 : vector<2x128xf32>
    %cst_31 = arith.constant 1.000000e+00 : f32
    %48 = vector.broadcast %cst_31 : f32 to vector<2x128xf32>
    %49 = arith.addf %48, %47 : vector<2x128xf32>
    %50 = arith.divf %48, %49 : vector<2x128xf32>
    %51 = vector.extract_strided_slice %50 {offsets = [0, 0], sizes = [2, 32], strides = [1, 1]} : vector<2x128xf32> to vector<2x32xf32>
    %52 = vector.extract_strided_slice %50 {offsets = [0, 32], sizes = [2, 32], strides = [1, 1]} : vector<2x128xf32> to vector<2x32xf32>
    %53 = vector.extract_strided_slice %50 {offsets = [0, 96], sizes = [2, 32], strides = [1, 1]} : vector<2x128xf32> to vector<2x32xf32>
    %54 = vector.extract_strided_slice %45 {offsets = [0, 64], sizes = [2, 32], strides = [1, 1]} : vector<2x128xf32> to vector<2x32xf32>
    %55 = math.tanh %54 : vector<2x32xf32>
    %56 = arith.mulf %52, %35 : vector<2x32xf32>
    %57 = arith.mulf %51, %55 : vector<2x32xf32>
    %58 = arith.addf %56, %57 : vector<2x32xf32>
    %59 = math.tanh %58 : vector<2x32xf32>
    %60 = arith.mulf %53, %59 : vector<2x32xf32>
    %c0_32 = arith.constant 0 : index
    %c1_33 = arith.constant 1 : index
    %c0_34 = arith.constant 0 : index
    %61 = vector.load %arg12[%c0_32, %c1_33, %c0_34] : memref<2x8x32xf32, #tpu.memory_space<vmem>>, vector<2x1x32xf32>
    %62 = vector.shape_cast %61 : vector<2x1x32xf32> to vector<2x32xf32>
    %63 = vector.shape_cast %60 : vector<2x32xf32> to vector<2x1x32xf32>
    tpu.vector_store %arg12[%c0_32, %c1_33, %c0_34], %63 {strides = array<i32>} : memref<2x8x32xf32, #tpu.memory_space<vmem>>, vector<2x1x32xf32>,
    %c0_35 = arith.constant 0 : index
    %c2 = arith.constant 2 : index
    %c0_36 = arith.constant 0 : index
    %64 = vector.load %arg11[%c0_35, %c2, %c0_36] : memref<2x8x128xf32, #tpu.memory_space<vmem>>, vector<2x1x128xf32>
    %65 = vector.shape_cast %64 : vector<2x1x128xf32> to vector<2x128xf32>
    %66 = arith.truncf %60 : vector<2x32xf32> to vector<2x32xbf16>
    %cst_37 = arith.constant dense<0.000000e+00> : vector<2x128xf32>
    %67 = tpu.matmul %66, %5, %cst_37 {dimension_numbers = #tpu.dot_dimension_numbers<[1], [0], [0], [1], [0, 0, 1, 1], [], []>} : vector<2x32xbf16>, vector<32x128xbf16>, vector<2x128xf32> -> vector<2x128xf32>
    %68 = arith.addf %65, %67 : vector<2x128xf32>
    %69 = arith.negf %68 : vector<2x128xf32>
    %70 = math.exp %69 : vector<2x128xf32>
    %cst_38 = arith.constant 1.000000e+00 : f32
    %71 = vector.broadcast %cst_38 : f32 to vector<2x128xf32>
    %72 = arith.addf %71, %70 : vector<2x128xf32>
    %73 = arith.divf %71, %72 : vector<2x128xf32>
    %74 = vector.extract_strided_slice %73 {offsets = [0, 0], sizes = [2, 32], strides = [1, 1]} : vector<2x128xf32> to vector<2x32xf32>
    %75 = vector.extract_strided_slice %73 {offsets = [0, 32], sizes = [2, 32], strides = [1, 1]} : vector<2x128xf32> to vector<2x32xf32>
    %76 = vector.extract_strided_slice %73 {offsets = [0, 96], sizes = [2, 32], strides = [1, 1]} : vector<2x128xf32> to vector<2x32xf32>
    %77 = vector.extract_strided_slice %68 {offsets = [0, 64], sizes = [2, 32], strides = [1, 1]} : vector<2x128xf32> to vector<2x32xf32>
    %78 = math.tanh %77 : vector<2x32xf32>
    %79 = arith.mulf %75, %58 : vector<2x32xf32>
    %80 = arith.mulf %74, %78 : vector<2x32xf32>
    %81 = arith.addf %79, %80 : vector<2x32xf32>
    %82 = math.tanh %81 : vector<2x32xf32>
    %83 = arith.mulf %76, %82 : vector<2x32xf32>
    %c0_39 = arith.constant 0 : index
    %c2_40 = arith.constant 2 : index
    %c0_41 = arith.constant 0 : index
    %84 = vector.load %arg12[%c0_39, %c2_40, %c0_41] : memref<2x8x32xf32, #tpu.memory_space<vmem>>, vector<2x1x32xf32>
    %85 = vector.shape_cast %84 : vector<2x1x32xf32> to vector<2x32xf32>
    %86 = vector.shape_cast %83 : vector<2x32xf32> to vector<2x1x32xf32>
    tpu.vector_store %arg12[%c0_39, %c2_40, %c0_41], %86 {strides = array<i32>} : memref<2x8x32xf32, #tpu.memory_space<vmem>>, vector<2x1x32xf32>,
    %c0_42 = arith.constant 0 : index
    %c3 = arith.constant 3 : index
    %c0_43 = arith.constant 0 : index
    %87 = vector.load %arg11[%c0_42, %c3, %c0_43] : memref<2x8x128xf32, #tpu.memory_space<vmem>>, vector<2x1x128xf32>
    %88 = vector.shape_cast %87 : vector<2x1x128xf32> to vector<2x128xf32>
    %89 = arith.truncf %83 : vector<2x32xf32> to vector<2x32xbf16>
    %cst_44 = arith.constant dense<0.000000e+00> : vector<2x128xf32>
    %90 = tpu.matmul %89, %5, %cst_44 {dimension_numbers = #tpu.dot_dimension_numbers<[1], [0], [0], [1], [0, 0, 1, 1], [], []>} : vector<2x32xbf16>, vector<32x128xbf16>, vector<2x128xf32> -> vector<2x128xf32>
    %91 = arith.addf %88, %90 : vector<2x128xf32>
    %92 = arith.negf %91 : vector<2x128xf32>
    %93 = math.exp %92 : vector<2x128xf32>
    %cst_45 = arith.constant 1.000000e+00 : f32
    %94 = vector.broadcast %cst_45 : f32 to vector<2x128xf32>
    %95 = arith.addf %94, %93 : vector<2x128xf32>
    %96 = arith.divf %94, %95 : vector<2x128xf32>
    %97 = vector.extract_strided_slice %96 {offsets = [0, 0], sizes = [2, 32], strides = [1, 1]} : vector<2x128xf32> to vector<2x32xf32>
    %98 = vector.extract_strided_slice %96 {offsets = [0, 32], sizes = [2, 32], strides = [1, 1]} : vector<2x128xf32> to vector<2x32xf32>
    %99 = vector.extract_strided_slice %96 {offsets = [0, 96], sizes = [2, 32], strides = [1, 1]} : vector<2x128xf32> to vector<2x32xf32>
    %100 = vector.extract_strided_slice %91 {offsets = [0, 64], sizes = [2, 32], strides = [1, 1]} : vector<2x128xf32> to vector<2x32xf32>
    %101 = math.tanh %100 : vector<2x32xf32>
    %102 = arith.mulf %98, %81 : vector<2x32xf32>
    %103 = arith.mulf %97, %101 : vector<2x32xf32>
    %104 = arith.addf %102, %103 : vector<2x32xf32>
    %105 = math.tanh %104 : vector<2x32xf32>
    %106 = arith.mulf %99, %105 : vector<2x32xf32>
    %c0_46 = arith.constant 0 : index
    %c3_47 = arith.constant 3 : index
    %c0_48 = arith.constant 0 : index
    %107 = vector.load %arg12[%c0_46, %c3_47, %c0_48] : memref<2x8x32xf32, #tpu.memory_space<vmem>>, vector<2x1x32xf32>
    %108 = vector.shape_cast %107 : vector<2x1x32xf32> to vector<2x32xf32>
    %109 = vector.shape_cast %106 : vector<2x32xf32> to vector<2x1x32xf32>
    tpu.vector_store %arg12[%c0_46, %c3_47, %c0_48], %109 {strides = array<i32>} : memref<2x8x32xf32, #tpu.memory_space<vmem>>, vector<2x1x32xf32>,
    %c0_49 = arith.constant 0 : index
    %c4 = arith.constant 4 : index
    %c0_50 = arith.constant 0 : index
    %110 = vector.load %arg11[%c0_49, %c4, %c0_50] : memref<2x8x128xf32, #tpu.memory_space<vmem>>, vector<2x1x128xf32>
    %111 = vector.shape_cast %110 : vector<2x1x128xf32> to vector<2x128xf32>
    %112 = arith.truncf %106 : vector<2x32xf32> to vector<2x32xbf16>
    %cst_51 = arith.constant dense<0.000000e+00> : vector<2x128xf32>
    %113 = tpu.matmul %112, %5, %cst_51 {dimension_numbers = #tpu.dot_dimension_numbers<[1], [0], [0], [1], [0, 0, 1, 1], [], []>} : vector<2x32xbf16>, vector<32x128xbf16>, vector<2x128xf32> -> vector<2x128xf32>
    %114 = arith.addf %111, %113 : vector<2x128xf32>
    %115 = arith.negf %114 : vector<2x128xf32>
    %116 = math.exp %115 : vector<2x128xf32>
    %cst_52 = arith.constant 1.000000e+00 : f32
    %117 = vector.broadcast %cst_52 : f32 to vector<2x128xf32>
    %118 = arith.addf %117, %116 : vector<2x128xf32>
    %119 = arith.divf %117, %118 : vector<2x128xf32>
    %120 = vector.extract_strided_slice %119 {offsets = [0, 0], sizes = [2, 32], strides = [1, 1]} : vector<2x128xf32> to vector<2x32xf32>
    %121 = vector.extract_strided_slice %119 {offsets = [0, 32], sizes = [2, 32], strides = [1, 1]} : vector<2x128xf32> to vector<2x32xf32>
    %122 = vector.extract_strided_slice %119 {offsets = [0, 96], sizes = [2, 32], strides = [1, 1]} : vector<2x128xf32> to vector<2x32xf32>
    %123 = vector.extract_strided_slice %114 {offsets = [0, 64], sizes = [2, 32], strides = [1, 1]} : vector<2x128xf32> to vector<2x32xf32>
    %124 = math.tanh %123 : vector<2x32xf32>
    %125 = arith.mulf %121, %104 : vector<2x32xf32>
    %126 = arith.mulf %120, %124 : vector<2x32xf32>
    %127 = arith.addf %125, %126 : vector<2x32xf32>
    %128 = math.tanh %127 : vector<2x32xf32>
    %129 = arith.mulf %122, %128 : vector<2x32xf32>
    %c0_53 = arith.constant 0 : index
    %c4_54 = arith.constant 4 : index
    %c0_55 = arith.constant 0 : index
    %130 = vector.load %arg12[%c0_53, %c4_54, %c0_55] : memref<2x8x32xf32, #tpu.memory_space<vmem>>, vector<2x1x32xf32>
    %131 = vector.shape_cast %130 : vector<2x1x32xf32> to vector<2x32xf32>
    %132 = vector.shape_cast %129 : vector<2x32xf32> to vector<2x1x32xf32>
    tpu.vector_store %arg12[%c0_53, %c4_54, %c0_55], %132 {strides = array<i32>} : memref<2x8x32xf32, #tpu.memory_space<vmem>>, vector<2x1x32xf32>,
    %c0_56 = arith.constant 0 : index
    %c5 = arith.constant 5 : index
    %c0_57 = arith.constant 0 : index
    %133 = vector.load %arg11[%c0_56, %c5, %c0_57] : memref<2x8x128xf32, #tpu.memory_space<vmem>>, vector<2x1x128xf32>
    %134 = vector.shape_cast %133 : vector<2x1x128xf32> to vector<2x128xf32>
    %135 = arith.truncf %129 : vector<2x32xf32> to vector<2x32xbf16>
    %cst_58 = arith.constant dense<0.000000e+00> : vector<2x128xf32>
    %136 = tpu.matmul %135, %5, %cst_58 {dimension_numbers = #tpu.dot_dimension_numbers<[1], [0], [0], [1], [0, 0, 1, 1], [], []>} : vector<2x32xbf16>, vector<32x128xbf16>, vector<2x128xf32> -> vector<2x128xf32>
    %137 = arith.addf %134, %136 : vector<2x128xf32>
    %138 = arith.negf %137 : vector<2x128xf32>
    %139 = math.exp %138 : vector<2x128xf32>
    %cst_59 = arith.constant 1.000000e+00 : f32
    %140 = vector.broadcast %cst_59 : f32 to vector<2x128xf32>
    %141 = arith.addf %140, %139 : vector<2x128xf32>
    %142 = arith.divf %140, %141 : vector<2x128xf32>
    %143 = vector.extract_strided_slice %142 {offsets = [0, 0], sizes = [2, 32], strides = [1, 1]} : vector<2x128xf32> to vector<2x32xf32>
    %144 = vector.extract_strided_slice %142 {offsets = [0, 32], sizes = [2, 32], strides = [1, 1]} : vector<2x128xf32> to vector<2x32xf32>
    %145 = vector.extract_strided_slice %142 {offsets = [0, 96], sizes = [2, 32], strides = [1, 1]} : vector<2x128xf32> to vector<2x32xf32>
    %146 = vector.extract_strided_slice %137 {offsets = [0, 64], sizes = [2, 32], strides = [1, 1]} : vector<2x128xf32> to vector<2x32xf32>
    %147 = math.tanh %146 : vector<2x32xf32>
    %148 = arith.mulf %144, %127 : vector<2x32xf32>
    %149 = arith.mulf %143, %147 : vector<2x32xf32>
    %150 = arith.addf %148, %149 : vector<2x32xf32>
    %151 = math.tanh %150 : vector<2x32xf32>
    %152 = arith.mulf %145, %151 : vector<2x32xf32>
    %c0_60 = arith.constant 0 : index
    %c5_61 = arith.constant 5 : index
    %c0_62 = arith.constant 0 : index
    %153 = vector.load %arg12[%c0_60, %c5_61, %c0_62] : memref<2x8x32xf32, #tpu.memory_space<vmem>>, vector<2x1x32xf32>
    %154 = vector.shape_cast %153 : vector<2x1x32xf32> to vector<2x32xf32>
    %155 = vector.shape_cast %152 : vector<2x32xf32> to vector<2x1x32xf32>
    tpu.vector_store %arg12[%c0_60, %c5_61, %c0_62], %155 {strides = array<i32>} : memref<2x8x32xf32, #tpu.memory_space<vmem>>, vector<2x1x32xf32>,
    %c0_63 = arith.constant 0 : index
    %c6 = arith.constant 6 : index
    %c0_64 = arith.constant 0 : index
    %156 = vector.load %arg11[%c0_63, %c6, %c0_64] : memref<2x8x128xf32, #tpu.memory_space<vmem>>, vector<2x1x128xf32>
    %157 = vector.shape_cast %156 : vector<2x1x128xf32> to vector<2x128xf32>
    %158 = arith.truncf %152 : vector<2x32xf32> to vector<2x32xbf16>
    %cst_65 = arith.constant dense<0.000000e+00> : vector<2x128xf32>
    %159 = tpu.matmul %158, %5, %cst_65 {dimension_numbers = #tpu.dot_dimension_numbers<[1], [0], [0], [1], [0, 0, 1, 1], [], []>} : vector<2x32xbf16>, vector<32x128xbf16>, vector<2x128xf32> -> vector<2x128xf32>
    %160 = arith.addf %157, %159 : vector<2x128xf32>
    %161 = arith.negf %160 : vector<2x128xf32>
    %162 = math.exp %161 : vector<2x128xf32>
    %cst_66 = arith.constant 1.000000e+00 : f32
    %163 = vector.broadcast %cst_66 : f32 to vector<2x128xf32>
    %164 = arith.addf %163, %162 : vector<2x128xf32>
    %165 = arith.divf %163, %164 : vector<2x128xf32>
    %166 = vector.extract_strided_slice %165 {offsets = [0, 0], sizes = [2, 32], strides = [1, 1]} : vector<2x128xf32> to vector<2x32xf32>
    %167 = vector.extract_strided_slice %165 {offsets = [0, 32], sizes = [2, 32], strides = [1, 1]} : vector<2x128xf32> to vector<2x32xf32>
    %168 = vector.extract_strided_slice %165 {offsets = [0, 96], sizes = [2, 32], strides = [1, 1]} : vector<2x128xf32> to vector<2x32xf32>
    %169 = vector.extract_strided_slice %160 {offsets = [0, 64], sizes = [2, 32], strides = [1, 1]} : vector<2x128xf32> to vector<2x32xf32>
    %170 = math.tanh %169 : vector<2x32xf32>
    %171 = arith.mulf %167, %150 : vector<2x32xf32>
    %172 = arith.mulf %166, %170 : vector<2x32xf32>
    %173 = arith.addf %171, %172 : vector<2x32xf32>
    %174 = math.tanh %173 : vector<2x32xf32>
    %175 = arith.mulf %168, %174 : vector<2x32xf32>
    %c0_67 = arith.constant 0 : index
    %c6_68 = arith.constant 6 : index
    %c0_69 = arith.constant 0 : index
    %176 = vector.load %arg12[%c0_67, %c6_68, %c0_69] : memref<2x8x32xf32, #tpu.memory_space<vmem>>, vector<2x1x32xf32>
    %177 = vector.shape_cast %176 : vector<2x1x32xf32> to vector<2x32xf32>
    %178 = vector.shape_cast %175 : vector<2x32xf32> to vector<2x1x32xf32>
    tpu.vector_store %arg12[%c0_67, %c6_68, %c0_69], %178 {strides = array<i32>} : memref<2x8x32xf32, #tpu.memory_space<vmem>>, vector<2x1x32xf32>,
    %c0_70 = arith.constant 0 : index
    %c7 = arith.constant 7 : index
    %c0_71 = arith.constant 0 : index
    %179 = vector.load %arg11[%c0_70, %c7, %c0_71] : memref<2x8x128xf32, #tpu.memory_space<vmem>>, vector<2x1x128xf32>
    %180 = vector.shape_cast %179 : vector<2x1x128xf32> to vector<2x128xf32>
    %181 = arith.truncf %175 : vector<2x32xf32> to vector<2x32xbf16>
    %cst_72 = arith.constant dense<0.000000e+00> : vector<2x128xf32>
    %182 = tpu.matmul %181, %5, %cst_72 {dimension_numbers = #tpu.dot_dimension_numbers<[1], [0], [0], [1], [0, 0, 1, 1], [], []>} : vector<2x32xbf16>, vector<32x128xbf16>, vector<2x128xf32> -> vector<2x128xf32>
    %183 = arith.addf %180, %182 : vector<2x128xf32>
    %184 = arith.negf %183 : vector<2x128xf32>
    %185 = math.exp %184 : vector<2x128xf32>
    %cst_73 = arith.constant 1.000000e+00 : f32
    %186 = vector.broadcast %cst_73 : f32 to vector<2x128xf32>
    %187 = arith.addf %186, %185 : vector<2x128xf32>
    %188 = arith.divf %186, %187 : vector<2x128xf32>
    %189 = vector.extract_strided_slice %188 {offsets = [0, 0], sizes = [2, 32], strides = [1, 1]} : vector<2x128xf32> to vector<2x32xf32>
    %190 = vector.extract_strided_slice %188 {offsets = [0, 32], sizes = [2, 32], strides = [1, 1]} : vector<2x128xf32> to vector<2x32xf32>
    %191 = vector.extract_strided_slice %188 {offsets = [0, 96], sizes = [2, 32], strides = [1, 1]} : vector<2x128xf32> to vector<2x32xf32>
    %192 = vector.extract_strided_slice %183 {offsets = [0, 64], sizes = [2, 32], strides = [1, 1]} : vector<2x128xf32> to vector<2x32xf32>
    %193 = math.tanh %192 : vector<2x32xf32>
    %194 = arith.mulf %190, %173 : vector<2x32xf32>
    %195 = arith.mulf %189, %193 : vector<2x32xf32>
    %196 = arith.addf %194, %195 : vector<2x32xf32>
    %197 = math.tanh %196 : vector<2x32xf32>
    %198 = arith.mulf %191, %197 : vector<2x32xf32>
    %c0_74 = arith.constant 0 : index
    %c7_75 = arith.constant 7 : index
    %c0_76 = arith.constant 0 : index
    %199 = vector.load %arg12[%c0_74, %c7_75, %c0_76] : memref<2x8x32xf32, #tpu.memory_space<vmem>>, vector<2x1x32xf32>
    %200 = vector.shape_cast %199 : vector<2x1x32xf32> to vector<2x32xf32>
    %201 = vector.shape_cast %198 : vector<2x32xf32> to vector<2x1x32xf32>
    tpu.vector_store %arg12[%c0_74, %c7_75, %c0_76], %201 {strides = array<i32>} : memref<2x8x32xf32, #tpu.memory_space<vmem>>, vector<2x1x32xf32>,
    %c0_77 = arith.constant 0 : index
    %c0_78 = arith.constant 0 : index
    %202 = vector.load %arg9[%c0_77, %c0_78] : memref<2x32xf32, #tpu.memory_space<vmem>>, vector<2x32xf32>
    tpu.vector_store %arg9[%c0_77, %c0_78], %198 {strides = array<i32>} : memref<2x32xf32, #tpu.memory_space<vmem>>, vector<2x32xf32>,
    %c0_79 = arith.constant 0 : index
    %c0_80 = arith.constant 0 : index
    %203 = vector.load %arg10[%c0_79, %c0_80] : memref<2x32xf32, #tpu.memory_space<vmem>>, vector<2x32xf32>
    tpu.vector_store %arg10[%c0_79, %c0_80], %196 {strides = array<i32>} : memref<2x32xf32, #tpu.memory_space<vmem>>, vector<2x32xf32>,
    %c0_81 = arith.constant 0 : index
    %c0_82 = arith.constant 0 : index
    %c0_83 = arith.constant 0 : index
    %204 = vector.load %arg12[%c0_81, %c0_82, %c0_83] : memref<2x8x32xf32, #tpu.memory_space<vmem>>, vector<2x8x32xf32>
    %205 = vector.shape_cast %204 : vector<2x8x32xf32> to vector<16x32xf32>
    %206 = arith.truncf %205 : vector<16x32xf32> to vector<16x32xbf16>
    %cst_84 = arith.constant dense<0.000000e+00> : vector<16x16xf32>
    %207 = tpu.matmul %206, %6, %cst_84 {dimension_numbers = #tpu.dot_dimension_numbers<[1], [0], [0], [1], [0, 0, 1, 1], [], []>} : vector<16x32xbf16>, vector<32x16xbf16>, vector<16x16xf32> -> vector<16x16xf32>
    %208 = vector.broadcast %7 : vector<1x16xf32> to vector<16x16xf32>
    %209 = arith.addf %207, %208 : vector<16x16xf32>
    %210 = vector.shape_cast %209 : vector<16x16xf32> to vector<2x8x16xf32>
    %c0_85 = arith.constant 0 : index
    %c0_86 = arith.constant 0 : index
    %c0_87 = arith.constant 0 : index
    %211 = vector.load %arg8[%c0_85, %c0_86, %c0_87] : memref<2x8x16xf32, #tpu.memory_space<vmem>>, vector<2x8x16xf32>
    tpu.vector_store %arg8[%c0_85, %c0_86, %c0_87], %210 {strides = array<i32>} : memref<2x8x16xf32, #tpu.memory_space<vmem>>, vector<2x8x16xf32>,
    return
  }
  func.func @transform_0(%arg0: i32, %arg1: i32) -> (i32, i32, i32) {
    %c0_i32 = arith.constant 0 : i32
    %c0_i32_0 = arith.constant 0 : i32
    return %arg0, %arg1, %c0_i32 : i32, i32, i32
  }
  func.func @transform_1(%arg0: i32, %arg1: i32) -> (i32, i32) {
    %c0_i32 = arith.constant 0 : i32
    %c0_i32_0 = arith.constant 0 : i32
    %c0_i32_1 = arith.constant 0 : i32
    return %c0_i32, %c0_i32_0 : i32, i32
  }
  func.func @transform_2(%arg0: i32, %arg1: i32) -> (i32, i32) {
    %c0_i32 = arith.constant 0 : i32
    %c0_i32_0 = arith.constant 0 : i32
    %c0_i32_1 = arith.constant 0 : i32
    return %c0_i32, %c0_i32_0 : i32, i32
  }
  func.func @transform_3(%arg0: i32, %arg1: i32) -> (i32, i32) {
    %c0_i32 = arith.constant 0 : i32
    %c0_i32_0 = arith.constant 0 : i32
    %c0_i32_1 = arith.constant 0 : i32
    return %c0_i32, %c0_i32_0 : i32, i32
  }
  func.func @transform_4(%arg0: i32, %arg1: i32) -> (i32, i32) {
    %c0_i32 = arith.constant 0 : i32
    %c0_i32_0 = arith.constant 0 : i32
    %c0_i32_1 = arith.constant 0 : i32
    return %c0_i32, %c0_i32_0 : i32, i32
  }
  func.func @transform_5(%arg0: i32, %arg1: i32) -> (i32, i32) {
    %c0_i32 = arith.constant 0 : i32
    %c0_i32_0 = arith.constant 0 : i32
    %c0_i32_1 = arith.constant 0 : i32
    return %c0_i32, %c0_i32_0 : i32, i32
  }
  func.func @transform_6(%arg0: i32, %arg1: i32) -> (i32, i32, i32) {
    %c0_i32 = arith.constant 0 : i32
    %c0_i32_0 = arith.constant 0 : i32
    return %arg0, %arg1, %c0_i32 : i32, i32, i32
  }
}

</mosaic_0001>

<llo_original>
// kernel: lstm_ed_forward.1
$region0: #{lstm_ed_forward.1}
  #allocation0 [shape = 'u32[]', space=smem, size = 0x4, offset = 0x4, fixed_abs, tag = 'smem constant byte address 0x4 - core index']
  #allocation1 [shape = 'u32[72,128]{1,0:T(1,128)}', space=vmem, size = 0x9000, scoped, tag = 'internal scratch']
  #allocation2 [shape = 'f32[2,32]{1,0:T(2,128)}', space=vmem, size = 0x400, scoped, tag = 'scratch operand']
  #allocation3 [shape = 'f32[2,32]{1,0:T(2,128)}', space=vmem, size = 0x400, scoped, tag = 'scratch operand']
  #allocation4 [shape = 'f32[2,8,128]{2,1,0:T(8,128)}', space=vmem, size = 0x2000, scoped, tag = 'scratch operand']
  #allocation5 [shape = 'f32[2,8,32]{2,1,0:T(8,128)}', space=vmem, size = 0x2000, scoped, tag = 'scratch operand']
  %s0 = inlined_call_operand.vmem [shape: f32[2,8,16], index: 0, kind: input, shape index: {}]
  %s1 = inlined_call_operand.vmem [shape: bf16[16,128], index: 1, kind: input, shape index: {}]
  %s2 = inlined_call_operand.vmem [shape: f32[1,128], index: 2, kind: input, shape index: {}]
  %s3 = inlined_call_operand.vmem [shape: bf16[32,128], index: 3, kind: input, shape index: {}]
  %s4 = inlined_call_operand.vmem [shape: bf16[32,16], index: 4, kind: input, shape index: {}]
  %s5 = inlined_call_operand.vmem [shape: f32[1,16], index: 5, kind: input, shape index: {}]
  %s6 = inlined_call_operand.hbm [shape: f32[2,8,16], index: 6, kind: output, shape index: {}]
  %s7 = sld [smem:[#allocation0]]
  $region38: #{lstm_ed_forward.1} parent=0
    _
  %s9 = ssub.s32 1, %s7
  %s10 = scalar_select 0, %s9, %s7
  $region1: #{lstm_ed_forward.1} parent=0
    #allocation6 [shape = 'u8[8192]{0}', space=vmem, size = 0x2000, scoped, tag = 'output window, operand 0, single buffered']
    #allocation7 [shape = 's32[1]{0}', space=sflag, size = 0x4, scoped, tag = 'scoped memory for lstm_ed_forward.1']
    %11 = vsyncpa [#allocation7], 0
    // Predicated region
    $region2: #{lstm_ed_forward.1} parent=1 // pred_check
      _
    $region3: #{lstm_ed_forward.1} parent=1 // pred_check_branch
      %13 = sbr.rel (0) target = $region5
    $region4: #{lstm_ed_forward.1} parent=1 // pred_region
      _
    $region5: #{lstm_ed_forward.1} parent=1 // pred_fallthru
      _
    // Predicated region
    $region6: #{lstm_ed_forward.1} parent=1 // pred_check
      _
    $region7: #{lstm_ed_forward.1} parent=1 // pred_check_branch
      %15 = sbr.rel (0) target = $region9
    $region8: #{lstm_ed_forward.1} parent=1 // pred_region
      _
    $region9: #{lstm_ed_forward.1} parent=1 // pred_fallthru
      _
    // Predicated region
    $region10: #{lstm_ed_forward.1} parent=1 // pred_check
      _
    $region11: #{lstm_ed_forward.1} parent=1 // pred_check_branch
      %17 = sbr.rel (0) target = $region13
    $region12: #{lstm_ed_forward.1} parent=1 // pred_region
      _
    $region13: #{lstm_ed_forward.1} parent=1 // pred_fallthru
      _
    // Predicated region
    $region14: #{lstm_ed_forward.1} parent=1 // pred_check
      _
    $region15: #{lstm_ed_forward.1} parent=1 // pred_check_branch
      %19 = sbr.rel (0) target = $region17
    $region16: #{lstm_ed_forward.1} parent=1 // pred_region
      _
    $region17: #{lstm_ed_forward.1} parent=1 // pred_fallthru
      _
    // Predicated region
    $region18: #{lstm_ed_forward.1} parent=1 // pred_check
      _
    $region19: #{lstm_ed_forward.1} parent=1 // pred_check_branch
      %21 = sbr.rel (0) target = $region21
    $region20: #{lstm_ed_forward.1} parent=1 // pred_region
      _
    $region21: #{lstm_ed_forward.1} parent=1 // pred_fallthru
      _
    // Predicated region
    $region22: #{lstm_ed_forward.1} parent=1 // pred_check
      _
    $region23: #{lstm_ed_forward.1} parent=1 // pred_check_branch
      %23 = sbr.rel (0) target = $region25
    $region24: #{lstm_ed_forward.1} parent=1 // pred_region
      _
    $region25: #{lstm_ed_forward.1} parent=1 // pred_fallthru
      _
    %p25 = scmp.eq.s32.totalorder 0, 0
    // Predicated region
    $region26: #{lstm_ed_forward.1} parent=1 // pred_check
      %p26 = pneg %p25
    $region27: #{lstm_ed_forward.1} parent=1 // pred_check_branch
      %28 = sbr.rel (%p26) target = $region29
    $region28: #{lstm_ed_forward.1} parent=1 // pred_region
      %vm29 = vcmask 254976
      %30 = vst.msk [vmem:[#allocation2] sm:$0x3] %vm29, 0.0
      %31 = vst.msk [vmem:[#allocation3] sm:$0x3] %vm29, 0.0
    $region29: #{lstm_ed_forward.1} parent=1 // pred_fallthru
      _
    %v32 = vld [vmem:[%s1] sm:$0xf]
    %v33 = vld [vmem:[%s1 + $0x4] sm:$0xf]
    %v34 = vld [vmem:[%s2] sm:$0x1]
    %v35 = vld [vmem:[%s3] sm:$0xf]
    %v36 = vld [vmem:[%s3 + $0x4] sm:$0xf]
    %v37 = vld [vmem:[%s3 + $0x8] sm:$0xf]
    %v38 = vld [vmem:[%s3 + $0xc] sm:$0xf]
    %v39 = vld [vmem:[%s4] sm:$0xf]
    %v40 = vld [vmem:[%s4 + $0x4] sm:$0xf]
    %v41 = vld [vmem:[%s4 + $0x8] sm:$0xf]
    %v42 = vld [vmem:[%s4 + $0xc] sm:$0xf]
    %v43 = vld [vmem:[%s5] sm:$0x1]
    %v44 = vld [vmem:[%s0] sm:$0xff]
    %v45 = vld [vmem:[%s0 + $0x8] sm:$0xff]
    %v46 = vpack.c.bf16 %v45, %v44
    %v48 = vperm.slane %v34, 0
    %v52 = vunpack.c.l.b16 %v32
    %v53 = vunpack.c.l.b16 %v33
    %v54 = vpack.c.b16 %v53, %v52
    %vm56 = vcmask 130048
    %v58 = vsel %vm56, %v46, 0
    %60 = vmatpush.bf16.msra.mxu0 0
    %61 = vmatpush.bf16.msra.mxu0 0
    %62 = vmatpush.bf16.msra.mxu0 0
    %63 = vmatpush.bf16.msra.mxu0 0
    %64 = vmatpush.bf16.msra.mxu0 0
    %65 = vmatpush.bf16.msra.mxu0 0
    %66 = vmatpush.bf16.msra.mxu0 0
    %67 = vmatpush.bf16.msra.mxu0 %v54
    %68 = vmatmul.bf16.gmra.mxu0 %v58
    %v69 = vpop.f32.mrf.mxu0
    %v70 = vadd.f32 %v48, %v69
    %v71 = vpop.f32.mrf.mxu0
    %v72 = vadd.f32 %v48, %v71
    %73 = vdwg.mxu0
    %74 = vst [vmem:[#allocation4] sm:$0xff] %v70
    %75 = vst [vmem:[#allocation4 + $0x8] sm:$0xff] %v72
    %v76 = vld [vmem:[#allocation2] sm:$0x3]
    %v77 = vld [vmem:[#allocation3] sm:$0x3]
    %v78 = vld [vmem:[#allocation4] sm:$0x1]
    %v79 = vld [vmem:[#allocation4 + $0x8] sm:$0x1]
    %v80 = vpack.c.bf16 %v76, %v76
    %v85 = vunpack.c.l.b16 %v35
    %v86 = vunpack.c.l.b16 %v36
    %v87 = vunpack.c.l.b16 %v37
    %v88 = vunpack.c.l.b16 %v38
    %v89 = vpack.c.b16 %v86, %v85
    %v90 = vpack.c.b16 %v88, %v87
    %vm93 = vcmask 261120
    %v95 = vsel %vm93, %v80, 0
    %97 = vmatpush.bf16.msra.mxu0 0
    %98 = vmatpush.bf16.msra.mxu0 0
    %99 = vmatpush.bf16.msra.mxu0 0
    %100 = vmatpush.bf16.msra.mxu0 0
    %101 = vmatpush.bf16.msra.mxu0 0
    %102 = vmatpush.bf16.msra.mxu0 0
    %103 = vmatpush.bf16.msra.mxu0 %v90
    %104 = vmatpush.bf16.msra.mxu0 %v89
    %105 = vmatmul.bf16.gmra.mxu0 %v95
    %v106 = vpop.f32.mrf.mxu0
    %v107 = vadd.f32 0.0, %v106
    %v108 = vpop.f32.mrf.mxu0
    %109 = vdwg.mxu0
    %v111 = vrot.slane %v107, 1
    %v114 = vadd.f32 %v78, %v107
    %v115 = vadd.f32 %v79, %v111
    %v116 = vxor.u32 %v114, 2147483648
    %v117 = vxor.u32 %v115, 2147483648
    %v118 = vmul.f32 %v116, 1.442695
    %v119 = vpow.pop %v118
    %v120 = vmul.f32 %v117, 1.442695
    %v121 = vpow.pop %v120
    %v122 = vadd.f32 %v119, 1.0
    %v123 = vadd.f32 %v121, 1.0
    %v124 = vrcp.pop %v122
    %v125 = vmul.f32 %v122, %v124
    %v126 = vsub.f32 1.0, %v125
    %v127 = vmul.f32 %v124, %v126
    %v128 = vadd.f32 %v124, %v127
    %vm129 = vweird.f32 %v122
    %vm130 = vweird.f32 %v124
    %vm131 = vmor %vm129, %vm130
    %v132 = vsel %vm131, %v124, %v128
    %v133 = vand.u32 2147483647, %v122
    %vm134 = vcmp.eq.f32.partialorder %v133, 8.507059e+37
    %v135 = vand.u32 %v122, 2147483648
    %v136 = vor.u32 1.1754944e-38, %v135
    %v137 = vsel %vm134, %v136, %v132
    %v138 = vmul.f32 1.0, %v137
    %v139 = vrcp.pop %v123
    %v140 = vmul.f32 %v123, %v139
    %v141 = vsub.f32 1.0, %v140
    %v142 = vmul.f32 %v139, %v141
    %v143 = vadd.f32 %v139, %v142
    %vm144 = vweird.f32 %v123
    %vm145 = vweird.f32 %v139
    %vm146 = vmor %vm144, %vm145
    %v147 = vsel %vm146, %v139, %v143
    %v148 = vand.u32 2147483647, %v123
    %vm149 = vcmp.eq.f32.partialorder %v148, 8.507059e+37
    %v150 = vand.u32 %v123, 2147483648
    %v151 = vor.u32 1.1754944e-38, %v150
    %v152 = vsel %vm149, %v151, %v147
    %v153 = vmul.f32 1.0, %v152
    %v154 = vtanh.pop %v114
    %v155 = vtanh.pop %v115
    %v157 = vrot.slane %v77, 1
    %158 = vrot.lane.b32.xlu0 %v77, 32
    %v159 = vpop.permute.xlu0 %158
    %160 = vrot.lane.b32.xlu0 %v157, 32
    %v161 = vpop.permute.xlu0 %160
    %v164 = vmul.f32 %v138, %v159
    %v165 = vmul.f32 %v153, %v161
    %168 = vrot.lane.b32.xlu0 %v154, 64
    %v169 = vpop.permute.xlu0 %168
    %170 = vrot.lane.b32.xlu0 %v155, 64
    %v171 = vpop.permute.xlu0 %170
    %v174 = vmul.f32 %v138, %v169
    %v175 = vmul.f32 %v153, %v171
    %178 = vrot.lane.b32.xlu0 %v174, 32
    %v179 = vpop.permute.xlu0 %178
    %180 = vrot.lane.b32.xlu0 %v175, 32
    %v181 = vpop.permute.xlu0 %180
    %v184 = vadd.f32 %v164, %v179
    %v185 = vadd.f32 %v165, %v181
    %v186 = vtanh.pop %v184
    %v187 = vtanh.pop %v185
    %190 = vrot.lane.b32.xlu0 %v186, 64
    %v191 = vpop.permute.xlu0 %190
    %192 = vrot.lane.b32.xlu0 %v187, 64
    %v193 = vpop.permute.xlu0 %192
    %v196 = vmul.f32 %v138, %v191
    %v197 = vmul.f32 %v153, %v193
    %200 = vrot.lane.b32.xlu0 %v196, 32
    %v201 = vpop.permute.xlu0 %200
    %202 = vrot.lane.b32.xlu0 %v197, 32
    %v203 = vpop.permute.xlu0 %202
    %vm206 = vcmask 253952
    %207 = vst.msk [vmem:[#allocation5] sm:$0x1] %vm206, %v201
    %208 = vst.msk [vmem:[#allocation5 + $0x8] sm:$0x1] %vm206, %v203
    %v209 = vld [vmem:[#allocation4 + $0x1] sm:$0x1]
    %v210 = vld [vmem:[#allocation4 + $0x9] sm:$0x1]
    %v211 = vpack.c.bf16 %v196, %v196
    %v212 = vpack.c.bf16 %v197, %v197
    %v215 = vunpack.c.l.b16 %v211
    %v216 = vunpack.c.l.b16 %v212
    %v217 = vrot.slane %v216, 7
    %vm218 = vcmask 1041409
    %v219 = vsel %vm218, %v217, %v215
    %v220 = vpack.c.b16 %v219, %v219
    %221 = vrot.lane.b32.xlu0 %v220, 32
    %v222 = vpop.permute.xlu0 %221
    %v224 = vsel %vm93, %v222, 0
    %226 = vmatpush.bf16.msra.mxu0 0
    %227 = vmatpush.bf16.msra.mxu0 0
    %228 = vmatpush.bf16.msra.mxu0 0
    %229 = vmatpush.bf16.msra.mxu0 0
    %230 = vmatpush.bf16.msra.mxu0 0
    %231 = vmatpush.bf16.msra.mxu0 0
    %232 = vmatpush.bf16.msra.mxu0 %v90
    %233 = vmatpush.bf16.msra.mxu0 %v89
    %234 = vmatmul.bf16.gmra.mxu0 %v224
    %v235 = vpop.f32.mrf.mxu0
    %v236 = vadd.f32 0.0, %v235
    %v237 = vpop.f32.mrf.mxu0
    %238 = vdwg.mxu0
    %v240 = vrot.slane %v236, 1
    %v243 = vadd.f32 %v209, %v236
    %v244 = vadd.f32 %v210, %v240
    %v245 = vxor.u32 %v243, 2147483648
    %v246 = vxor.u32 %v244, 2147483648
    %v247 = vmul.f32 %v245, 1.442695
    %v248 = vpow.pop %v247
    %v249 = vmul.f32 %v246, 1.442695
    %v250 = vpow.pop %v249
    %v251 = vadd.f32 %v248, 1.0
    %v252 = vadd.f32 %v250, 1.0
    %v253 = vrcp.pop %v251
    %v254 = vmul.f32 %v251, %v253
    %v255 = vsub.f32 1.0, %v254
    %v256 = vmul.f32 %v253, %v255
    %v257 = vadd.f32 %v253, %v256
    %vm258 = vweird.f32 %v251
    %vm259 = vweird.f32 %v253
    %vm260 = vmor %vm258, %vm259
    %v261 = vsel %vm260, %v253, %v257
    %v262 = vand.u32 2147483647, %v251
    %vm263 = vcmp.eq.f32.partialorder %v262, 8.507059e+37
    %v264 = vand.u32 %v251, 2147483648
    %v265 = vor.u32 1.1754944e-38, %v264
    %v266 = vsel %vm263, %v265, %v261
    %v267 = vmul.f32 1.0, %v266
    %v268 = vrcp.pop %v252
    %v269 = vmul.f32 %v252, %v268
    %v270 = vsub.f32 1.0, %v269
    %v271 = vmul.f32 %v268, %v270
    %v272 = vadd.f32 %v268, %v271
    %vm273 = vweird.f32 %v252
    %vm274 = vweird.f32 %v268
    %vm275 = vmor %vm273, %vm274
    %v276 = vsel %vm275, %v268, %v272
    %v277 = vand.u32 2147483647, %v252
    %vm278 = vcmp.eq.f32.partialorder %v277, 8.507059e+37
    %v279 = vand.u32 %v252, 2147483648
    %v280 = vor.u32 1.1754944e-38, %v279
    %v281 = vsel %vm278, %v280, %v276
    %v282 = vmul.f32 1.0, %v281
    %v283 = vtanh.pop %v243
    %v284 = vtanh.pop %v244
    %v285 = vmul.f32 %v267, %v184
    %v286 = vmul.f32 %v282, %v185
    %289 = vrot.lane.b32.xlu0 %v283, 64
    %v290 = vpop.permute.xlu0 %289
    %291 = vrot.lane.b32.xlu0 %v284, 64
    %v292 = vpop.permute.xlu0 %291
    %v295 = vmul.f32 %v267, %v290
    %v296 = vmul.f32 %v282, %v292
    %299 = vrot.lane.b32.xlu0 %v295, 32
    %v300 = vpop.permute.xlu0 %299
    %301 = vrot.lane.b32.xlu0 %v296, 32
    %v302 = vpop.permute.xlu0 %301
    %v305 = vadd.f32 %v285, %v300
    %v306 = vadd.f32 %v286, %v302
    %v307 = vtanh.pop %v305
    %v308 = vtanh.pop %v306
    %311 = vrot.lane.b32.xlu0 %v307, 64
    %v312 = vpop.permute.xlu0 %311
    %313 = vrot.lane.b32.xlu0 %v308, 64
    %v314 = vpop.permute.xlu0 %313
    %v317 = vmul.f32 %v267, %v312
    %v318 = vmul.f32 %v282, %v314
    %321 = vrot.lane.b32.xlu0 %v317, 32
    %v322 = vpop.permute.xlu0 %321
    %323 = vrot.lane.b32.xlu0 %v318, 32
    %v324 = vpop.permute.xlu0 %323
    %327 = vst.msk [vmem:[#allocation5 + $0x1] sm:$0x1] %vm206, %v322
    %328 = vst.msk [vmem:[#allocation5 + $0x9] sm:$0x1] %vm206, %v324
    %v329 = vld [vmem:[#allocation4 + $0x2] sm:$0x1]
    %v330 = vld [vmem:[#allocation4 + $0xa] sm:$0x1]
    %v331 = vpack.c.bf16 %v317, %v317
    %v332 = vpack.c.bf16 %v318, %v318
    %v335 = vunpack.c.l.b16 %v331
    %v336 = vunpack.c.l.b16 %v332
    %v337 = vrot.slane %v336, 7
    %v338 = vsel %vm218, %v337, %v335
    %v339 = vpack.c.b16 %v338, %v338
    %340 = vrot.lane.b32.xlu0 %v339, 32
    %v341 = vpop.permute.xlu0 %340
    %v343 = vsel %vm93, %v341, 0
    %345 = vmatpush.bf16.msra.mxu0 0
    %346 = vmatpush.bf16.msra.mxu0 0
    %347 = vmatpush.bf16.msra.mxu0 0
    %348 = vmatpush.bf16.msra.mxu0 0
    %349 = vmatpush.bf16.msra.mxu0 0
    %350 = vmatpush.bf16.msra.mxu0 0
    %351 = vmatpush.bf16.msra.mxu0 %v90
    %352 = vmatpush.bf16.msra.mxu0 %v89
    %353 = vmatmul.bf16.gmra.mxu0 %v343
    %v354 = vpop.f32.mrf.mxu0
    %v355 = vadd.f32 0.0, %v354
    %v356 = vpop.f32.mrf.mxu0
    %357 = vdwg.mxu0
    %v359 = vrot.slane %v355, 1
    %v362 = vadd.f32 %v329, %v355
    %v363 = vadd.f32 %v330, %v359
    %v364 = vxor.u32 %v362, 2147483648
    %v365 = vxor.u32 %v363, 2147483648
    %v366 = vmul.f32 %v364, 1.442695
    %v367 = vpow.pop %v366
    %v368 = vmul.f32 %v365, 1.442695
    %v369 = vpow.pop %v368
    %v370 = vadd.f32 %v367, 1.0
    %v371 = vadd.f32 %v369, 1.0
    %v372 = vrcp.pop %v370
    %v373 = vmul.f32 %v370, %v372
    %v374 = vsub.f32 1.0, %v373
    %v375 = vmul.f32 %v372, %v374
    %v376 = vadd.f32 %v372, %v375
    %vm377 = vweird.f32 %v370
    %vm378 = vweird.f32 %v372
    %vm379 = vmor %vm377, %vm378
    %v380 = vsel %vm379, %v372, %v376
    %v381 = vand.u32 2147483647, %v370
    %vm382 = vcmp.eq.f32.partialorder %v381, 8.507059e+37
    %v383 = vand.u32 %v370, 2147483648
    %v384 = vor.u32 1.1754944e-38, %v383
    %v385 = vsel %vm382, %v384, %v380
    %v386 = vmul.f32 1.0, %v385
    %v387 = vrcp.pop %v371
    %v388 = vmul.f32 %v371, %v387
    %v389 = vsub.f32 1.0, %v388
    %v390 = vmul.f32 %v387, %v389
    %v391 = vadd.f32 %v387, %v390
    %vm392 = vweird.f32 %v371
    %vm393 = vweird.f32 %v387
    %vm394 = vmor %vm392, %vm393
    %v395 = vsel %vm394, %v387, %v391
    %v396 = vand.u32 2147483647, %v371
    %vm397 = vcmp.eq.f32.partialorder %v396, 8.507059e+37
    %v398 = vand.u32 %v371, 2147483648
    %v399 = vor.u32 1.1754944e-38, %v398
    %v400 = vsel %vm397, %v399, %v395
    %v401 = vmul.f32 1.0, %v400
    %v402 = vtanh.pop %v362
    %v403 = vtanh.pop %v363
    %v404 = vmul.f32 %v386, %v305
    %v405 = vmul.f32 %v401, %v306
    %408 = vrot.lane.b32.xlu0 %v402, 64
    %v409 = vpop.permute.xlu0 %408
    %410 = vrot.lane.b32.xlu0 %v403, 64
    %v411 = vpop.permute.xlu0 %410
    %v414 = vmul.f32 %v386, %v409
    %v415 = vmul.f32 %v401, %v411
    %418 = vrot.lane.b32.xlu0 %v414, 32
    %v419 = vpop.permute.xlu0 %418
    %420 = vrot.lane.b32.xlu0 %v415, 32
    %v421 = vpop.permute.xlu0 %420
    %v424 = vadd.f32 %v404, %v419
    %v425 = vadd.f32 %v405, %v421
    %v426 = vtanh.pop %v424
    %v427 = vtanh.pop %v425
    %430 = vrot.lane.b32.xlu0 %v426, 64
    %v431 = vpop.permute.xlu0 %430
    %432 = vrot.lane.b32.xlu0 %v427, 64
    %v433 = vpop.permute.xlu0 %432
    %v436 = vmul.f32 %v386, %v431
    %v437 = vmul.f32 %v401, %v433
    %440 = vrot.lane.b32.xlu0 %v436, 32
    %v441 = vpop.permute.xlu0 %440
    %442 = vrot.lane.b32.xlu0 %v437, 32
    %v443 = vpop.permute.xlu0 %442
    %446 = vst.msk [vmem:[#allocation5 + $0x2] sm:$0x1] %vm206, %v441
    %447 = vst.msk [vmem:[#allocation5 + $0xa] sm:$0x1] %vm206, %v443
    %v448 = vld [vmem:[#allocation4 + $0x3] sm:$0x1]
    %v449 = vld [vmem:[#allocation4 + $0xb] sm:$0x1]
    %v450 = vpack.c.bf16 %v436, %v436
    %v451 = vpack.c.bf16 %v437, %v437
    %v454 = vunpack.c.l.b16 %v450
    %v455 = vunpack.c.l.b16 %v451
    %v456 = vrot.slane %v455, 7
    %v457 = vsel %vm218, %v456, %v454
    %v458 = vpack.c.b16 %v457, %v457
    %459 = vrot.lane.b32.xlu0 %v458, 32
    %v460 = vpop.permute.xlu0 %459
    %v462 = vsel %vm93, %v460, 0
    %464 = vmatpush.bf16.msra.mxu0 0
    %465 = vmatpush.bf16.msra.mxu0 0
    %466 = vmatpush.bf16.msra.mxu0 0
    %467 = vmatpush.bf16.msra.mxu0 0
    %468 = vmatpush.bf16.msra.mxu0 0
    %469 = vmatpush.bf16.msra.mxu0 0
    %470 = vmatpush.bf16.msra.mxu0 %v90
    %471 = vmatpush.bf16.msra.mxu0 %v89
    %472 = vmatmul.bf16.gmra.mxu0 %v462
    %v473 = vpop.f32.mrf.mxu0
    %v474 = vadd.f32 0.0, %v473
    %v475 = vpop.f32.mrf.mxu0
    %476 = vdwg.mxu0
    %v478 = vrot.slane %v474, 1
    %v481 = vadd.f32 %v448, %v474
    %v482 = vadd.f32 %v449, %v478
    %v483 = vxor.u32 %v481, 2147483648
    %v484 = vxor.u32 %v482, 2147483648
    %v485 = vmul.f32 %v483, 1.442695
    %v486 = vpow.pop %v485
    %v487 = vmul.f32 %v484, 1.442695
    %v488 = vpow.pop %v487
    %v489 = vadd.f32 %v486, 1.0
    %v490 = vadd.f32 %v488, 1.0
    %v491 = vrcp.pop %v489
    %v492 = vmul.f32 %v489, %v491
    %v493 = vsub.f32 1.0, %v492
    %v494 = vmul.f32 %v491, %v493
    %v495 = vadd.f32 %v491, %v494
    %vm496 = vweird.f32 %v489
    %vm497 = vweird.f32 %v491
    %vm498 = vmor %vm496, %vm497
    %v499 = vsel %vm498, %v491, %v495
    %v500 = vand.u32 2147483647, %v489
    %vm501 = vcmp.eq.f32.partialorder %v500, 8.507059e+37
    %v502 = vand.u32 %v489, 2147483648
    %v503 = vor.u32 1.1754944e-38, %v502
    %v504 = vsel %vm501, %v503, %v499
    %v505 = vmul.f32 1.0, %v504
    %v506 = vrcp.pop %v490
    %v507 = vmul.f32 %v490, %v506
    %v508 = vsub.f32 1.0, %v507
    %v509 = vmul.f32 %v506, %v508
    %v510 = vadd.f32 %v506, %v509
    %vm511 = vweird.f32 %v490
    %vm512 = vweird.f32 %v506
    %vm513 = vmor %vm511, %vm512
    %v514 = vsel %vm513, %v506, %v510
    %v515 = vand.u32 2147483647, %v490
    %vm516 = vcmp.eq.f32.partialorder %v515, 8.507059e+37
    %v517 = vand.u32 %v490, 2147483648
    %v518 = vor.u32 1.1754944e-38, %v517
    %v519 = vsel %vm516, %v518, %v514
    %v520 = vmul.f32 1.0, %v519
    %v521 = vtanh.pop %v481
    %v522 = vtanh.pop %v482
    %v523 = vmul.f32 %v505, %v424
    %v524 = vmul.f32 %v520, %v425
    %527 = vrot.lane.b32.xlu0 %v521, 64
    %v528 = vpop.permute.xlu0 %527
    %529 = vrot.lane.b32.xlu0 %v522, 64
    %v530 = vpop.permute.xlu0 %529
    %v533 = vmul.f32 %v505, %v528
    %v534 = vmul.f32 %v520, %v530
    %537 = vrot.lane.b32.xlu0 %v533, 32
    %v538 = vpop.permute.xlu0 %537
    %539 = vrot.lane.b32.xlu0 %v534, 32
    %v540 = vpop.permute.xlu0 %539
    %v543 = vadd.f32 %v523, %v538
    %v544 = vadd.f32 %v524, %v540
    %v545 = vtanh.pop %v543
    %v546 = vtanh.pop %v544
    %549 = vrot.lane.b32.xlu0 %v545, 64
    %v550 = vpop.permute.xlu0 %549
    %551 = vrot.lane.b32.xlu0 %v546, 64
    %v552 = vpop.permute.xlu0 %551
    %v555 = vmul.f32 %v505, %v550
    %v556 = vmul.f32 %v520, %v552
    %559 = vrot.lane.b32.xlu0 %v555, 32
    %v560 = vpop.permute.xlu0 %559
    %561 = vrot.lane.b32.xlu0 %v556, 32
    %v562 = vpop.permute.xlu0 %561
    %565 = vst.msk [vmem:[#allocation5 + $0x3] sm:$0x1] %vm206, %v560
    %566 = vst.msk [vmem:[#allocation5 + $0xb] sm:$0x1] %vm206, %v562
    %v567 = vld [vmem:[#allocation4 + $0x4] sm:$0x1]
    %v568 = vld [vmem:[#allocation4 + $0xc] sm:$0x1]
    %v569 = vpack.c.bf16 %v555, %v555
    %v570 = vpack.c.bf16 %v556, %v556
    %v573 = vunpack.c.l.b16 %v569
    %v574 = vunpack.c.l.b16 %v570
    %v575 = vrot.slane %v574, 7
    %v576 = vsel %vm218, %v575, %v573
    %v577 = vpack.c.b16 %v576, %v576
    %578 = vrot.lane.b32.xlu0 %v577, 32
    %v579 = vpop.permute.xlu0 %578
    %v581 = vsel %vm93, %v579, 0
    %583 = vmatpush.bf16.msra.mxu0 0
    %584 = vmatpush.bf16.msra.mxu0 0
    %585 = vmatpush.bf16.msra.mxu0 0
    %586 = vmatpush.bf16.msra.mxu0 0
    %587 = vmatpush.bf16.msra.mxu0 0
    %588 = vmatpush.bf16.msra.mxu0 0
    %589 = vmatpush.bf16.msra.mxu0 %v90
    %590 = vmatpush.bf16.msra.mxu0 %v89
    %591 = vmatmul.bf16.gmra.mxu0 %v581
    %v592 = vpop.f32.mrf.mxu0
    %v593 = vadd.f32 0.0, %v592
    %v594 = vpop.f32.mrf.mxu0
    %595 = vdwg.mxu0
    %v597 = vrot.slane %v593, 1
    %v600 = vadd.f32 %v567, %v593
    %v601 = vadd.f32 %v568, %v597
    %v602 = vxor.u32 %v600, 2147483648
    %v603 = vxor.u32 %v601, 2147483648
    %v604 = vmul.f32 %v602, 1.442695
    %v605 = vpow.pop %v604
    %v606 = vmul.f32 %v603, 1.442695
    %v607 = vpow.pop %v606
    %v608 = vadd.f32 %v605, 1.0
    %v609 = vadd.f32 %v607, 1.0
    %v610 = vrcp.pop %v608
    %v611 = vmul.f32 %v608, %v610
    %v612 = vsub.f32 1.0, %v611
    %v613 = vmul.f32 %v610, %v612
    %v614 = vadd.f32 %v610, %v613
    %vm615 = vweird.f32 %v608
    %vm616 = vweird.f32 %v610
    %vm617 = vmor %vm615, %vm616
    %v618 = vsel %vm617, %v610, %v614
    %v619 = vand.u32 2147483647, %v608
    %vm620 = vcmp.eq.f32.partialorder %v619, 8.507059e+37
    %v621 = vand.u32 %v608, 2147483648
    %v622 = vor.u32 1.1754944e-38, %v621
    %v623 = vsel %vm620, %v622, %v618
    %v624 = vmul.f32 1.0, %v623
    %v625 = vrcp.pop %v609
    %v626 = vmul.f32 %v609, %v625
    %v627 = vsub.f32 1.0, %v626
    %v628 = vmul.f32 %v625, %v627
    %v629 = vadd.f32 %v625, %v628
    %vm630 = vweird.f32 %v609
    %vm631 = vweird.f32 %v625
    %vm632 = vmor %vm630, %vm631
    %v633 = vsel %vm632, %v625, %v629
    %v634 = vand.u32 2147483647, %v609
    %vm635 = vcmp.eq.f32.partialorder %v634, 8.507059e+37
    %v636 = vand.u32 %v609, 2147483648
    %v637 = vor.u32 1.1754944e-38, %v636
    %v638 = vsel %vm635, %v637, %v633
    %v639 = vmul.f32 1.0, %v638
    %v640 = vtanh.pop %v600
    %v641 = vtanh.pop %v601
    %v642 = vmul.f32 %v624, %v543
    %v643 = vmul.f32 %v639, %v544
    %646 = vrot.lane.b32.xlu0 %v640, 64
    %v647 = vpop.permute.xlu0 %646
    %648 = vrot.lane.b32.xlu0 %v641, 64
    %v649 = vpop.permute.xlu0 %648
    %v652 = vmul.f32 %v624, %v647
    %v653 = vmul.f32 %v639, %v649
    %656 = vrot.lane.b32.xlu0 %v652, 32
    %v657 = vpop.permute.xlu0 %656
    %658 = vrot.lane.b32.xlu0 %v653, 32
    %v659 = vpop.permute.xlu0 %658
    %v662 = vadd.f32 %v642, %v657
    %v663 = vadd.f32 %v643, %v659
    %v664 = vtanh.pop %v662
    %v665 = vtanh.pop %v663
    %668 = vrot.lane.b32.xlu0 %v664, 64
    %v669 = vpop.permute.xlu0 %668
    %670 = vrot.lane.b32.xlu0 %v665, 64
    %v671 = vpop.permute.xlu0 %670
    %v674 = vmul.f32 %v624, %v669
    %v675 = vmul.f32 %v639, %v671
    %678 = vrot.lane.b32.xlu0 %v674, 32
    %v679 = vpop.permute.xlu0 %678
    %680 = vrot.lane.b32.xlu0 %v675, 32
    %v681 = vpop.permute.xlu0 %680
    %684 = vst.msk [vmem:[#allocation5 + $0x4] sm:$0x1] %vm206, %v679
    %685 = vst.msk [vmem:[#allocation5 + $0xc] sm:$0x1] %vm206, %v681
    %v686 = vld [vmem:[#allocation4 + $0x5] sm:$0x1]
    %v687 = vld [vmem:[#allocation4 + $0xd] sm:$0x1]
    %v688 = vpack.c.bf16 %v674, %v674
    %v689 = vpack.c.bf16 %v675, %v675
    %v692 = vunpack.c.l.b16 %v688
    %v693 = vunpack.c.l.b16 %v689
    %v694 = vrot.slane %v693, 7
    %v695 = vsel %vm218, %v694, %v692
    %v696 = vpack.c.b16 %v695, %v695
    %697 = vrot.lane.b32.xlu0 %v696, 32
    %v698 = vpop.permute.xlu0 %697
    %v700 = vsel %vm93, %v698, 0
    %702 = vmatpush.bf16.msra.mxu0 0
    %703 = vmatpush.bf16.msra.mxu0 0
    %704 = vmatpush.bf16.msra.mxu0 0
    %705 = vmatpush.bf16.msra.mxu0 0
    %706 = vmatpush.bf16.msra.mxu0 0
    %707 = vmatpush.bf16.msra.mxu0 0
    %708 = vmatpush.bf16.msra.mxu0 %v90
    %709 = vmatpush.bf16.msra.mxu0 %v89
    %710 = vmatmul.bf16.gmra.mxu0 %v700
    %v711 = vpop.f32.mrf.mxu0
    %v712 = vadd.f32 0.0, %v711
    %v713 = vpop.f32.mrf.mxu0
    %714 = vdwg.mxu0
    %v716 = vrot.slane %v712, 1
    %v719 = vadd.f32 %v686, %v712
    %v720 = vadd.f32 %v687, %v716
    %v721 = vxor.u32 %v719, 2147483648
    %v722 = vxor.u32 %v720, 2147483648
    %v723 = vmul.f32 %v721, 1.442695
    %v724 = vpow.pop %v723
    %v725 = vmul.f32 %v722, 1.442695
    %v726 = vpow.pop %v725
    %v727 = vadd.f32 %v724, 1.0
    %v728 = vadd.f32 %v726, 1.0
    %v729 = vrcp.pop %v727
    %v730 = vmul.f32 %v727, %v729
    %v731 = vsub.f32 1.0, %v730
    %v732 = vmul.f32 %v729, %v731
    %v733 = vadd.f32 %v729, %v732
    %vm734 = vweird.f32 %v727
    %vm735 = vweird.f32 %v729
    %vm736 = vmor %vm734, %vm735
    %v737 = vsel %vm736, %v729, %v733
    %v738 = vand.u32 2147483647, %v727
    %vm739 = vcmp.eq.f32.partialorder %v738, 8.507059e+37
    %v740 = vand.u32 %v727, 2147483648
    %v741 = vor.u32 1.1754944e-38, %v740
    %v742 = vsel %vm739, %v741, %v737
    %v743 = vmul.f32 1.0, %v742
    %v744 = vrcp.pop %v728
    %v745 = vmul.f32 %v728, %v744
    %v746 = vsub.f32 1.0, %v745
    %v747 = vmul.f32 %v744, %v746
    %v748 = vadd.f32 %v744, %v747
    %vm749 = vweird.f32 %v728
    %vm750 = vweird.f32 %v744
    %vm751 = vmor %vm749, %vm750
    %v752 = vsel %vm751, %v744, %v748
    %v753 = vand.u32 2147483647, %v728
    %vm754 = vcmp.eq.f32.partialorder %v753, 8.507059e+37
    %v755 = vand.u32 %v728, 2147483648
    %v756 = vor.u32 1.1754944e-38, %v755
    %v757 = vsel %vm754, %v756, %v752
    %v758 = vmul.f32 1.0, %v757
    %v759 = vtanh.pop %v719
    %v760 = vtanh.pop %v720
    %v761 = vmul.f32 %v743, %v662
    %v762 = vmul.f32 %v758, %v663
    %765 = vrot.lane.b32.xlu0 %v759, 64
    %v766 = vpop.permute.xlu0 %765
    %767 = vrot.lane.b32.xlu0 %v760, 64
    %v768 = vpop.permute.xlu0 %767
    %v771 = vmul.f32 %v743, %v766
    %v772 = vmul.f32 %v758, %v768
    %775 = vrot.lane.b32.xlu0 %v771, 32
    %v776 = vpop.permute.xlu0 %775
    %777 = vrot.lane.b32.xlu0 %v772, 32
    %v778 = vpop.permute.xlu0 %777
    %v781 = vadd.f32 %v761, %v776
    %v782 = vadd.f32 %v762, %v778
    %v783 = vtanh.pop %v781
    %v784 = vtanh.pop %v782
    %787 = vrot.lane.b32.xlu0 %v783, 64
    %v788 = vpop.permute.xlu0 %787
    %789 = vrot.lane.b32.xlu0 %v784, 64
    %v790 = vpop.permute.xlu0 %789
    %v793 = vmul.f32 %v743, %v788
    %v794 = vmul.f32 %v758, %v790
    %797 = vrot.lane.b32.xlu0 %v793, 32
    %v798 = vpop.permute.xlu0 %797
    %799 = vrot.lane.b32.xlu0 %v794, 32
    %v800 = vpop.permute.xlu0 %799
    %803 = vst.msk [vmem:[#allocation5 + $0x5] sm:$0x1] %vm206, %v798
    %804 = vst.msk [vmem:[#allocation5 + $0xd] sm:$0x1] %vm206, %v800
    %v805 = vld [vmem:[#allocation4 + $0x6] sm:$0x1]
    %v806 = vld [vmem:[#allocation4 + $0xe] sm:$0x1]
    %v807 = vpack.c.bf16 %v793, %v793
    %v808 = vpack.c.bf16 %v794, %v794
    %v811 = vunpack.c.l.b16 %v807
    %v812 = vunpack.c.l.b16 %v808
    %v813 = vrot.slane %v812, 7
    %v814 = vsel %vm218, %v813, %v811
    %v815 = vpack.c.b16 %v814, %v814
    %816 = vrot.lane.b32.xlu0 %v815, 32
    %v817 = vpop.permute.xlu0 %816
    %v819 = vsel %vm93, %v817, 0
    %821 = vmatpush.bf16.msra.mxu0 0
    %822 = vmatpush.bf16.msra.mxu0 0
    %823 = vmatpush.bf16.msra.mxu0 0
    %824 = vmatpush.bf16.msra.mxu0 0
    %825 = vmatpush.bf16.msra.mxu0 0
    %826 = vmatpush.bf16.msra.mxu0 0
    %827 = vmatpush.bf16.msra.mxu0 %v90
    %828 = vmatpush.bf16.msra.mxu0 %v89
    %829 = vmatmul.bf16.gmra.mxu0 %v819
    %v830 = vpop.f32.mrf.mxu0
    %v831 = vadd.f32 0.0, %v830
    %v832 = vpop.f32.mrf.mxu0
    %833 = vdwg.mxu0
    %v835 = vrot.slane %v831, 1
    %v838 = vadd.f32 %v805, %v831
    %v839 = vadd.f32 %v806, %v835
    %v840 = vxor.u32 %v838, 2147483648
    %v841 = vxor.u32 %v839, 2147483648
    %v842 = vmul.f32 %v840, 1.442695
    %v843 = vpow.pop %v842
    %v844 = vmul.f32 %v841, 1.442695
    %v845 = vpow.pop %v844
    %v846 = vadd.f32 %v843, 1.0
    %v847 = vadd.f32 %v845, 1.0
    %v848 = vrcp.pop %v846
    %v849 = vmul.f32 %v846, %v848
    %v850 = vsub.f32 1.0, %v849
    %v851 = vmul.f32 %v848, %v850
    %v852 = vadd.f32 %v848, %v851
    %vm853 = vweird.f32 %v846
    %vm854 = vweird.f32 %v848
    %vm855 = vmor %vm853, %vm854
    %v856 = vsel %vm855, %v848, %v852
    %v857 = vand.u32 2147483647, %v846
    %vm858 = vcmp.eq.f32.partialorder %v857, 8.507059e+37
    %v859 = vand.u32 %v846, 2147483648
    %v860 = vor.u32 1.1754944e-38, %v859
    %v861 = vsel %vm858, %v860, %v856
    %v862 = vmul.f32 1.0, %v861
    %v863 = vrcp.pop %v847
    %v864 = vmul.f32 %v847, %v863
    %v865 = vsub.f32 1.0, %v864
    %v866 = vmul.f32 %v863, %v865
    %v867 = vadd.f32 %v863, %v866
    %vm868 = vweird.f32 %v847
    %vm869 = vweird.f32 %v863
    %vm870 = vmor %vm868, %vm869
    %v871 = vsel %vm870, %v863, %v867
    %v872 = vand.u32 2147483647, %v847
    %vm873 = vcmp.eq.f32.partialorder %v872, 8.507059e+37
    %v874 = vand.u32 %v847, 2147483648
    %v875 = vor.u32 1.1754944e-38, %v874
    %v876 = vsel %vm873, %v875, %v871
    %v877 = vmul.f32 1.0, %v876
    %v878 = vtanh.pop %v838
    %v879 = vtanh.pop %v839
    %v880 = vmul.f32 %v862, %v781
    %v881 = vmul.f32 %v877, %v782
    %884 = vrot.lane.b32.xlu0 %v878, 64
    %v885 = vpop.permute.xlu0 %884
    %886 = vrot.lane.b32.xlu0 %v879, 64
    %v887 = vpop.permute.xlu0 %886
    %v890 = vmul.f32 %v862, %v885
    %v891 = vmul.f32 %v877, %v887
    %894 = vrot.lane.b32.xlu0 %v890, 32
    %v895 = vpop.permute.xlu0 %894
    %896 = vrot.lane.b32.xlu0 %v891, 32
    %v897 = vpop.permute.xlu0 %896
    %v900 = vadd.f32 %v880, %v895
    %v901 = vadd.f32 %v881, %v897
    %v902 = vtanh.pop %v900
    %v903 = vtanh.pop %v901
    %906 = vrot.lane.b32.xlu0 %v902, 64
    %v907 = vpop.permute.xlu0 %906
    %908 = vrot.lane.b32.xlu0 %v903, 64
    %v909 = vpop.permute.xlu0 %908
    %v912 = vmul.f32 %v862, %v907
    %v913 = vmul.f32 %v877, %v909
    %916 = vrot.lane.b32.xlu0 %v912, 32
    %v917 = vpop.permute.xlu0 %916
    %918 = vrot.lane.b32.xlu0 %v913, 32
    %v919 = vpop.permute.xlu0 %918
    %922 = vst.msk [vmem:[#allocation5 + $0x6] sm:$0x1] %vm206, %v917
    %923 = vst.msk [vmem:[#allocation5 + $0xe] sm:$0x1] %vm206, %v919
    %v924 = vld [vmem:[#allocation4 + $0x7] sm:$0x1]
    %v925 = vld [vmem:[#allocation4 + $0xf] sm:$0x1]
    %v926 = vpack.c.bf16 %v912, %v912
    %v927 = vpack.c.bf16 %v913, %v913
    %v930 = vunpack.c.l.b16 %v926
    %v931 = vunpack.c.l.b16 %v927
    %v932 = vrot.slane %v931, 7
    %v933 = vsel %vm218, %v932, %v930
    %v934 = vpack.c.b16 %v933, %v933
    %935 = vrot.lane.b32.xlu0 %v934, 32
    %v936 = vpop.permute.xlu0 %935
    %v938 = vsel %vm93, %v936, 0
    %940 = vmatpush.bf16.msra.mxu0 0
    %941 = vmatpush.bf16.msra.mxu0 0
    %942 = vmatpush.bf16.msra.mxu0 0
    %943 = vmatpush.bf16.msra.mxu0 0
    %944 = vmatpush.bf16.msra.mxu0 0
    %945 = vmatpush.bf16.msra.mxu0 0
    %946 = vmatpush.bf16.msra.mxu0 %v90
    %947 = vmatpush.bf16.msra.mxu0 %v89
    %948 = vmatmul.bf16.gmra.mxu0 %v938
    %v949 = vpop.f32.mrf.mxu0
    %v950 = vadd.f32 0.0, %v949
    %v951 = vpop.f32.mrf.mxu0
    %952 = vdwg.mxu0
    %v954 = vrot.slane %v950, 1
    %v957 = vadd.f32 %v924, %v950
    %v958 = vadd.f32 %v925, %v954
    %v959 = vxor.u32 %v957, 2147483648
    %v960 = vxor.u32 %v958, 2147483648
    %v961 = vmul.f32 %v959, 1.442695
    %v962 = vpow.pop %v961
    %v963 = vmul.f32 %v960, 1.442695
    %v964 = vpow.pop %v963
    %v965 = vadd.f32 %v962, 1.0
    %v966 = vadd.f32 %v964, 1.0
    %v967 = vrcp.pop %v965
    %v968 = vmul.f32 %v965, %v967
    %v969 = vsub.f32 1.0, %v968
    %v970 = vmul.f32 %v967, %v969
    %v971 = vadd.f32 %v967, %v970
    %vm972 = vweird.f32 %v965
    %vm973 = vweird.f32 %v967
    %vm974 = vmor %vm972, %vm973
    %v975 = vsel %vm974, %v967, %v971
    %v976 = vand.u32 2147483647, %v965
    %vm977 = vcmp.eq.f32.partialorder %v976, 8.507059e+37
    %v978 = vand.u32 %v965, 2147483648
    %v979 = vor.u32 1.1754944e-38, %v978
    %v980 = vsel %vm977, %v979, %v975
    %v981 = vmul.f32 1.0, %v980
    %v982 = vrcp.pop %v966
    %v983 = vmul.f32 %v966, %v982
    %v984 = vsub.f32 1.0, %v983
    %v985 = vmul.f32 %v982, %v984
    %v986 = vadd.f32 %v982, %v985
    %vm987 = vweird.f32 %v966
    %vm988 = vweird.f32 %v982
    %vm989 = vmor %vm987, %vm988
    %v990 = vsel %vm989, %v982, %v986
    %v991 = vand.u32 2147483647, %v966
    %vm992 = vcmp.eq.f32.partialorder %v991, 8.507059e+37
    %v993 = vand.u32 %v966, 2147483648
    %v994 = vor.u32 1.1754944e-38, %v993
    %v995 = vsel %vm992, %v994, %v990
    %v996 = vmul.f32 1.0, %v995
    %v997 = vtanh.pop %v957
    %v998 = vtanh.pop %v958
    %v999 = vmul.f32 %v981, %v900
    %v1000 = vmul.f32 %v996, %v901
    %1003 = vrot.lane.b32.xlu0 %v997, 64
    %v1004 = vpop.permute.xlu0 %1003
    %1005 = vrot.lane.b32.xlu0 %v998, 64
    %v1006 = vpop.permute.xlu0 %1005
    %v1009 = vmul.f32 %v981, %v1004
    %v1010 = vmul.f32 %v996, %v1006
    %1013 = vrot.lane.b32.xlu0 %v1009, 32
    %v1014 = vpop.permute.xlu0 %1013
    %1015 = vrot.lane.b32.xlu0 %v1010, 32
    %v1016 = vpop.permute.xlu0 %1015
    %v1019 = vadd.f32 %v999, %v1014
    %v1020 = vadd.f32 %v1000, %v1016
    %v1021 = vtanh.pop %v1019
    %v1022 = vtanh.pop %v1020
    %1025 = vrot.lane.b32.xlu0 %v1021, 64
    %v1026 = vpop.permute.xlu0 %1025
    %1027 = vrot.lane.b32.xlu0 %v1022, 64
    %v1028 = vpop.permute.xlu0 %1027
    %v1031 = vmul.f32 %v981, %v1026
    %v1032 = vmul.f32 %v996, %v1028
    %1035 = vrot.lane.b32.xlu0 %v1031, 32
    %v1036 = vpop.permute.xlu0 %1035
    %1037 = vrot.lane.b32.xlu0 %v1032, 32
    %v1038 = vpop.permute.xlu0 %1037
    %1041 = vst.msk [vmem:[#allocation5 + $0x7] sm:$0x1] %vm206, %v1036
    %1042 = vst.msk [vmem:[#allocation5 + $0xf] sm:$0x1] %vm206, %v1038
    %v1043 = vrot.slane %v1032, 7
    %v1044 = vsel %vm218, %v1043, %v1031
    %1045 = vrot.lane.b32.xlu0 %v1044, 32
    %v1046 = vpop.permute.xlu0 %1045
    %vm1048 = vcmask 254976
    %1049 = vst.msk [vmem:[#allocation2] sm:$0x3] %vm1048, %v1046
    %v1052 = vrot.slane %v1020, 7
    %v1053 = vsel %vm218, %v1052, %v1019
    %1054 = vrot.lane.b32.xlu0 %v1053, 96
    %v1055 = vpop.permute.xlu0 %1054
    %1057 = vst.msk [vmem:[#allocation3] sm:$0x3] %vm1048, %v1055
    %v1058 = vld [vmem:[#allocation5] sm:$0xff]
    %v1059 = vld [vmem:[#allocation5 + $0x8] sm:$0xff]
    %v1060 = vpack.c.bf16 %v1059, %v1058
    %v1062 = vperm.slane %v43, 0
    %v1068 = vunpack.c.l.b16 %v39
    %v1069 = vunpack.c.l.b16 %v40
    %v1070 = vunpack.c.l.b16 %v41
    %v1071 = vunpack.c.l.b16 %v42
    %v1072 = vpack.c.b16 %v1069, %v1068
    %v1073 = vpack.c.b16 %v1071, %v1070
    %v1077 = vsel %vm93, %v1060, 0
    %1079 = vmatpush.bf16.msra.mxu0 0
    %1080 = vmatpush.bf16.msra.mxu0 0
    %1081 = vmatpush.bf16.msra.mxu0 0
    %1082 = vmatpush.bf16.msra.mxu0 0
    %1083 = vmatpush.bf16.msra.mxu0 0
    %1084 = vmatpush.bf16.msra.mxu0 0
    %1085 = vmatpush.bf16.msra.mxu0 %v1073
    %1086 = vmatpush.bf16.msra.mxu0 %v1072
    %1087 = vmatmul.bf16.gmra.mxu0 %v1077
    %v1088 = vpop.f32.mrf.mxu0
    %v1089 = vadd.f32 %v1062, %v1088
    %v1090 = vpop.f32.mrf.mxu0
    %v1091 = vadd.f32 %v1062, %v1090
    %1092 = vdwg.mxu0
    %1093 = vst.msk [vmem:[#allocation6] sm:$0xff] %vm56, %v1089
    %1094 = vst.msk [vmem:[#allocation6 + $0x8] sm:$0xff] %vm56, %v1091
    // Predicated region
    $region30: #{lstm_ed_forward.1} parent=1 // pred_check
      _
    $region31: #{lstm_ed_forward.1} parent=1 // pred_check_branch
      %1096 = sbr.rel (0) target = $region33
    $region32: #{lstm_ed_forward.1} parent=1 // pred_region
      %1098 = vsyncadd [#allocation7], 0
      %s1099 = sshll.u32 [#allocation6], 4
      %s1100 = int_to_ptr.vmem [resolvable:$true] %s1099
      %s1101 = sshll.u32 %s6, 4
      %s1102 = int_to_ptr.hbm [resolvable:$true] %s1101
      %1107 = dma.vmem_to_hbm [thread:$0]  %s1100, 256, %s1102, [#allocation7], 128, 128, 8
    $region33: #{lstm_ed_forward.1} parent=1 // pred_fallthru
      _
    // Predicated region
    $region34: #{lstm_ed_forward.1} parent=1 // pred_check
      _
    $region35: #{lstm_ed_forward.1} parent=1 // pred_check_branch
      %1109 = sbr.rel (0) target = $region37
    $region36: #{lstm_ed_forward.1} parent=1 // pred_region
      %1111 = dma.done [#allocation7], 256
    $region37: #{lstm_ed_forward.1} parent=1 // pred_fallthru
      _
    %1112 = vsyncpa [#allocation7], 1

</llo_original>
